<compile_context>
chip_gen: v7x
topology: tpu7x:2x2x1
jax: 0.10.0
libtpu: 0.0.40
codegen_flags: <defaults>
</compile_context>

<pallas_src>
import functools

import jax
import jax.numpy as jnp
from jax.experimental import pallas as pl
from jax.experimental.pallas import tpu as pltpu


def _round_up(x, m):
    return (x + m - 1) // m * m


def _pick_tile(total, candidates):
    for c in candidates:
        if c <= total and total % c == 0:
            return c
    return total


def _vmem_capacity_bytes():
    try:
        info = pltpu.get_tpu_info()
        return int(getattr(info, "vmem_capacity_bytes", 64 * 1024 * 1024))
    except Exception:
        return 64 * 1024 * 1024


_VMEM_CAP = _vmem_capacity_bytes()
if _VMEM_CAP >= 100 * 1024 * 1024:      # v5e / v6e: 128 MiB VMEM per TensorCore
    _VMEM_LIMIT = 100 * 1024 * 1024
    _ROW_TILES = (512, 256, 128)
else:                                    # v7x: 64 MiB per TensorCore
    _VMEM_LIMIT = 48 * 1024 * 1024
    _ROW_TILES = (256, 128)


# ----------------------------------------------------------------------------
# Fused QKV projection: x read once per tile, full-width MXU matmuls,
# head-major (B, H, Tp, dh) outputs (scale folded into Q).
# ----------------------------------------------------------------------------
def _qkv_kernel(x_ref, wq_ref, wk_ref, wv_ref, bq_ref, bk_ref, bv_ref,
                q_ref, k_ref, v_ref, *, num_heads, head_dim, scale):
    x = x_ref[0]                                         # (tq, D) bf16
    q = jnp.dot(x, wq_ref[...], preferred_element_type=jnp.float32) + bq_ref[...]
    q = (q * scale).astype(q_ref.dtype)
    k = (jnp.dot(x, wk_ref[...], preferred_element_type=jnp.float32)
         + bk_ref[...]).astype(k_ref.dtype)
    v = (jnp.dot(x, wv_ref[...], preferred_element_type=jnp.float32)
         + bv_ref[...]).astype(v_ref.dtype)
    # redistribute the lane dim into head-major layout once, here (instead of
    # re-slicing per head on every attention grid step).
    for h in range(num_heads):
        lo = h * head_dim
        q_ref[0, h, :, :] = q[:, lo:lo + head_dim]
        k_ref[0, h, :, :] = k[:, lo:lo + head_dim]
        v_ref[0, h, :, :] = v[:, lo:lo + head_dim]


def qkv_projection(x, wq, wk, wv, bq, bk, bv, scale, tq, num_heads, head_dim):
    B, Tp, D = x.shape
    out_sh = jax.ShapeDtypeStruct((B, num_heads, Tp, head_dim), jnp.bfloat16)
    whole = lambda b, i: (0, 0)
    kernel = functools.partial(_qkv_kernel, num_heads=num_heads,
                               head_dim=head_dim, scale=scale)
    return pl.pallas_call(
        kernel,
        out_shape=[out_sh, out_sh, out_sh],
        grid=(B, Tp // tq),
        in_specs=[
            pl.BlockSpec((1, tq, D), lambda b, i: (b, i, 0)),
            pl.BlockSpec((D, D), whole),
            pl.BlockSpec((D, D), whole),
            pl.BlockSpec((D, D), whole),
            pl.BlockSpec((1, D), whole),
            pl.BlockSpec((1, D), whole),
            pl.BlockSpec((1, D), whole),
        ],
        out_specs=[pl.BlockSpec((1, num_heads, tq, head_dim),
                                lambda b, i: (b, 0, i, 0))] * 3,
        compiler_params=pltpu.CompilerParams(
            dimension_semantics=("parallel", "parallel"),
            vmem_limit_bytes=_VMEM_LIMIT),
    )(x, wq, wk, wv, bq.reshape(1, D), bk.reshape(1, D), bv.reshape(1, D))


# ----------------------------------------------------------------------------
# Multi-head attention, tiled over query blocks.
#   grid = (B, Tp//tq); K/V resident per batch (constant index_map along q-tiles).
#   Per-head results accumulate into VMEM scratch; one lane-dense (tq, D) output
#   store and one bf16 (tq, Tp) head-averaged-weights store per step.
# ----------------------------------------------------------------------------
def _mha_kernel(q_ref, k_ref, v_ref, bias_ref, o_ref, w_ref, o_acc, w_acc,
                *, num_heads, head_dim):
    bias = bias_ref[0]                                   # (1, Tp) f32 key-padding mask
    for h in range(num_heads):
        qh = q_ref[0, h, :, :]                           # (tq, dh) bf16, pre-scaled
        kh = k_ref[0, h, :, :]                           # (Tp, dh) bf16
        vh = v_ref[0, h, :, :]                           # (Tp, dh) bf16
        s = jax.lax.dot_general(qh, kh, (((1,), (1,)), ((), ())),
                                preferred_element_type=jnp.float32)   # (tq, Tp)
        s = s + bias
        mx = jnp.max(s, axis=-1, keepdims=True)
        p = jnp.exp(s - mx)
        p = p * pl.reciprocal(jnp.sum(p, axis=-1, keepdims=True), approx=True)
        if h == 0:
            w_acc[...] = p
        else:
            w_acc[...] += p
        o_acc[:, h * head_dim:(h + 1) * head_dim] = jnp.dot(
            p.astype(vh.dtype), vh, preferred_element_type=jnp.float32)
    o_ref[0] = o_acc[...].astype(o_ref.dtype)
    w_ref[0] = (w_acc[...] * (1.0 / num_heads)).astype(w_ref.dtype)


def multihead_attention(q, k, v, bias, num_heads, head_dim, tq):
    B, H, Tp, dh = q.shape
    D = H * dh
    kernel = functools.partial(_mha_kernel, num_heads=num_heads, head_dim=head_dim)
    kv_spec = pl.BlockSpec((1, H, Tp, dh), lambda b, i: (b, 0, 0, 0))
    out, weights = pl.pallas_call(
        kernel,
        out_shape=[
            jax.ShapeDtypeStruct((B, Tp, D), jnp.bfloat16),
            jax.ShapeDtypeStruct((B, Tp, Tp), jnp.bfloat16),
        ],
        grid=(B, Tp // tq),
        in_specs=[
            pl.BlockSpec((1, H, tq, dh), lambda b, i: (b, 0, i, 0)),
            kv_spec, kv_spec,
            pl.BlockSpec((1, 1, Tp), lambda b, i: (b, 0, 0)),
        ],
        out_specs=[
            pl.BlockSpec((1, tq, D), lambda b, i: (b, i, 0)),
            pl.BlockSpec((1, tq, Tp), lambda b, i: (b, i, 0)),
        ],
        scratch_shapes=[pltpu.VMEM((tq, D), jnp.float32),
                        pltpu.VMEM((tq, Tp), jnp.float32)],
        compiler_params=pltpu.CompilerParams(
            dimension_semantics=("parallel", "parallel"),
            vmem_limit_bytes=_VMEM_LIMIT),
    )(q, k, v, bias)
    return out, weights


# ----------------------------------------------------------------------------
# Fused output projection + residual add + LayerNorm0 (bf16 streams, f32 stats)
# ----------------------------------------------------------------------------
def _wo_add_ln_kernel(a_ref, res_ref, wo_ref, bo_ref, g_ref, b_ref, o_ref):
    acc = jnp.dot(a_ref[...], wo_ref[...],
                  preferred_element_type=jnp.float32) + bo_ref[...]
    y = acc + res_ref[...].astype(jnp.float32)
    mean = jnp.mean(y, axis=-1, keepdims=True)
    var = jnp.mean(jnp.square(y - mean), axis=-1, keepdims=True)
    yn = (y - mean) * jax.lax.rsqrt(var + 1e-5)
    o_ref[...] = (yn * g_ref[...] + b_ref[...]).astype(o_ref.dtype)


def wo_add_ln(attn, residual, wo, bo, gamma, beta, tm):
    M, D = attn.shape
    row = lambda i: (i, 0)
    whole = lambda i: (0, 0)
    return pl.pallas_call(
        _wo_add_ln_kernel,
        out_shape=jax.ShapeDtypeStruct((M, D), jnp.bfloat16),
        grid=(M // tm,),
        in_specs=[
            pl.BlockSpec((tm, D), row),
            pl.BlockSpec((tm, D), row),
            pl.BlockSpec((D, D), whole),
            pl.BlockSpec((1, D), whole),
            pl.BlockSpec((1, D), whole),
            pl.BlockSpec((1, D), whole),
        ],
        out_specs=pl.BlockSpec((tm, D), row),
        compiler_params=pltpu.CompilerParams(
            dimension_semantics=("parallel",),
            vmem_limit_bytes=_VMEM_LIMIT),
    )(attn, residual, wo, bo.reshape(1, D), gamma.reshape(1, D), beta.reshape(1, D))


# ----------------------------------------------------------------------------
# Fused FFN (fc2(relu(fc1(x)))) + residual add + LayerNorm1.
# F is a reduction ("arbitrary") grid axis: W1/W2 are streamed in F-tiles with a
# (tm, D) f32 accumulator scratch (scales to large D*F on 64 MiB VMEM parts).
# ----------------------------------------------------------------------------
def _ffn_add_ln_kernel(x_ref, w1_ref, b1_ref, w2_ref, b2_ref, g_ref, b_ref,
                       o_ref, acc_ref):
    f = pl.program_id(1)

    @pl.when(f == 0)
    def _():
        acc_ref[...] = jnp.zeros_like(acc_ref)

    x = x_ref[...]                                       # (tm, D) bf16
    h = jnp.dot(x, w1_ref[...], preferred_element_type=jnp.float32) + b1_ref[...]
    h = jnp.maximum(h, 0.0).astype(jnp.bfloat16)
    acc_ref[...] += jnp.dot(h, w2_ref[...], preferred_element_type=jnp.float32)

    @pl.when(f == pl.num_programs(1) - 1)
    def _():
        y = acc_ref[...] + b2_ref[...] + x_ref[...].astype(jnp.float32)
        mean = jnp.mean(y, axis=-1, keepdims=True)
        var = jnp.mean(jnp.square(y - mean), axis=-1, keepdims=True)
        yn = (y - mean) * jax.lax.rsqrt(var + 1e-5)
        o_ref[...] = (yn * g_ref[...] + b_ref[...]).astype(o_ref.dtype)


def ffn_add_ln(x, w1, b1, w2, b2, gamma, beta, tm, tf):
    M, D = x.shape
    F = w1.shape[1]
    return pl.pallas_call(
        _ffn_add_ln_kernel,
        out_shape=jax.ShapeDtypeStruct((M, D), jnp.float32),
        grid=(M // tm, F // tf),
        in_specs=[
            pl.BlockSpec((tm, D), lambda i, f: (i, 0)),
            pl.BlockSpec((D, tf), lambda i, f: (0, f)),
            pl.BlockSpec((1, tf), lambda i, f: (0, f)),
            pl.BlockSpec((tf, D), lambda i, f: (f, 0)),
            pl.BlockSpec((1, D), lambda i, f: (0, 0)),
            pl.BlockSpec((1, D), lambda i, f: (0, 0)),
            pl.BlockSpec((1, D), lambda i, f: (0, 0)),
        ],
        out_specs=pl.BlockSpec((tm, D), lambda i, f: (i, 0)),
        scratch_shapes=[pltpu.VMEM((tm, D), jnp.float32)],
        compiler_params=pltpu.CompilerParams(
            dimension_semantics=("parallel", "arbitrary"),
            vmem_limit_bytes=_VMEM_LIMIT),
    )(x, w1, b1.reshape(1, F), w2, b2.reshape(1, D),
      gamma.reshape(1, D), beta.reshape(1, D))


# ----------------------------------------------------------------------------
# Parameter init (deterministic, synthetic).  Weight matrices are stored in bf16
# once here so there is no per-forward cast / HBM round trip.
# ----------------------------------------------------------------------------
def init_params(key, embed_dim, ffn_dim):
    ks = jax.random.split(key, 8)
    s = 1.0 / jnp.sqrt(embed_dim)
    sf = 1.0 / jnp.sqrt(ffn_dim)
    normal = lambda k, shape, sc: (jax.random.normal(k, shape, jnp.float32) * sc
                                   ).astype(jnp.bfloat16)
    return {
        "wq": normal(ks[0], (embed_dim, embed_dim), s),
        "wk": normal(ks[1], (embed_dim, embed_dim), s),
        "wv": normal(ks[2], (embed_dim, embed_dim), s),
        "wo": normal(ks[3], (embed_dim, embed_dim), s),
        "bq": jnp.zeros((embed_dim,), jnp.float32),
        "bk": jnp.zeros((embed_dim,), jnp.float32),
        "bv": jnp.zeros((embed_dim,), jnp.float32),
        "bo": jnp.zeros((embed_dim,), jnp.float32),
        "w_fc1": normal(ks[4], (embed_dim, ffn_dim), s),
        "b_fc1": jnp.zeros((ffn_dim,), jnp.float32),
        "w_fc2": normal(ks[5], (ffn_dim, embed_dim), sf),
        "b_fc2": jnp.zeros((embed_dim,), jnp.float32),
        "ln0_g": jnp.ones((embed_dim,), jnp.float32),
        "ln0_b": jnp.zeros((embed_dim,), jnp.float32),
        "ln1_g": jnp.ones((embed_dim,), jnp.float32),
        "ln1_b": jnp.zeros((embed_dim,), jnp.float32),
    }


def nstack_merge_encoder_layer(x_le, x_no, ntree_mask, hier_embed, pad_mask,
                               key_pad, node_pad, params, num_heads):
    """Mirrors NstackMergeTransformerEncoderLayer.forward in eval mode.

    encoder_normalize_before = False (fairseq default) -> post-norm residual blocks.
    ntree_mask / hier_embed / pad_mask are accepted for signature parity but unused
    (see TODO(synk) at top of file).
    """
    n, b, d = x_le.shape
    m = x_no.shape[0]
    assert d % num_heads == 0, "embed_dim must be divisible by num_heads"
    dh = d // num_heads
    T = n + m
    Tp = _round_up(T, 128)          # lane-aligned sequence length
    M = b * Tp                      # row count for row-tiled kernels
    F = params["w_fc1"].shape[1]
    scale = float(dh) ** -0.5

    tm = _pick_tile(M, _ROW_TILES)                 # generation-dependent row tile
    tq = _pick_tile(Tp, (256, 128))                # attention / QKV query tile
    tf = F if F <= 2048 else _pick_tile(F, (2048, 1024, 512, 256, 128))

    # (T, B, D) -> batch-major (B, Tp, D) bf16 activation stream.
    x = jnp.concatenate([x_le, x_no], axis=0)
    xb = jnp.transpose(x, (1, 0, 2))
    xp = jnp.pad(xb, ((0, 0), (0, Tp - T), (0, 0))).astype(jnp.bfloat16)

    # ---- fused QKV projection (head-major outputs, 1/sqrt(dh) folded into q) --
    q, k, v = qkv_projection(xp, params["wq"], params["wk"], params["wv"],
                             params["bq"], params["bk"], params["bv"],
                             scale, tq, num_heads, dh)

    # additive key-padding mask (True = pad); T padding is also masked out
    pad = jnp.concatenate([key_pad, node_pad], axis=1)               # (B, T)
    pad = jnp.pad(pad, ((0, 0), (0, Tp - T)), constant_values=True)  # (B, Tp)
    bias = jnp.where(pad, -1e9, 0.0).astype(jnp.float32)[:, None, :]  # (B, 1, Tp)

    # ---- q-tiled multi-head self-attention (K/V resident per batch) -----------
    attn, weights = multihead_attention(q, k, v, bias, num_heads, dh, tq)

    # ---- output projection + residual + LayerNorm0 (fused) --------------------
    x_flat = xp.reshape(M, d)
    y = wo_add_ln(attn.reshape(M, d), x_flat, params["wo"], params["bo"],
                  params["ln0_g"], params["ln0_b"], tm)

    # ---- FFN (F-tiled) + residual + LayerNorm1 (fused) ------------------------
    y = ffn_add_ln(y, params["w_fc1"], params["b_fc1"], params["w_fc2"],
                   params["b_fc2"], params["ln1_g"], params["ln1_b"], tm, tf)

    out = jnp.transpose(y.reshape(b, Tp, d)[:, :T, :], (1, 0, 2))    # (T, B, D)
    weights = weights[:, :T, :T]                                     # (B, T, T) bf16
    return out[:n], out[n:], weights


# ----------------------------------------------------------------------------
# Demo
# ----------------------------------------------------------------------------
if __name__ == "__main__":
    key = jax.random.PRNGKey(0)
    n, m, b = 8, 4, 2          # leaves, nodes, batch
    d, heads, ffn_dim = 32, 4, 64

    k0, k1, kp = jax.random.split(key, 3)
    x_le = jax.random.normal(k0, (n, b, d), jnp.float32)
    x_no = jax.random.normal(k1, (m, b, d), jnp.float32)

    # padding masks (True = padded position)
    key_pad = jnp.zeros((b, n), jnp.bool_).at[1, n - 2:].set(True)
    node_pad = jnp.zeros((b, m), jnp.bool_).at[1, m - 1:].set(True)

    # signature-parity placeholders (unused by the simplified attention)
    ntree_mask = jnp.ones((b * heads, n, m, 1), jnp.float32)
    hier_embed = jnp.zeros((b * heads, n, m, d // heads), jnp.float32)
    pad_mask = jnp.zeros((b, n + m), jnp.bool_)

    params = init_params(kp, d, ffn_dim)

    o_le, o_no, w = nstack_merge_encoder_layer(
        x_le, x_no, ntree_mask, hier_embed, pad_mask, key_pad, node_pad,
        params, heads)
    jax.block_until_ready((o_le, o_no, w))

    assert o_le.shape == (n, b, d) and o_no.shape == (m, b, d)
    assert w.shape == (b, n + m, n + m)
    assert bool(jnp.all(jnp.isfinite(o_le))) and bool(jnp.all(jnp.isfinite(o_no)))
    print("KERNEL_OK")
</pallas_src>

<mosaic_0001>
module attributes {stable_mosaic.version = 11 : i64} {
  func.func @_qkv_kernel(%arg0: i32, %arg1: i32, %arg2: memref<1x128x32xbf16, #tpu.memory_space<vmem>>, %arg3: memref<32x32xbf16, #tpu.memory_space<vmem>>, %arg4: memref<32x32xbf16, #tpu.memory_space<vmem>>, %arg5: memref<32x32xbf16, #tpu.memory_space<vmem>>, %arg6: memref<1x32xf32, #tpu.memory_space<vmem>>, %arg7: memref<1x32xf32, #tpu.memory_space<vmem>>, %arg8: memref<1x32xf32, #tpu.memory_space<vmem>>, %arg9: memref<1x4x128x8xbf16, #tpu.memory_space<vmem>>, %arg10: memref<1x4x128x8xbf16, #tpu.memory_space<vmem>>, %arg11: memref<1x4x128x8xbf16, #tpu.memory_space<vmem>>) attributes {dimension_semantics = [#tpu.dimension_semantics<parallel>, #tpu.dimension_semantics<parallel>], iteration_bounds = array<i64: 2, 1>, scalar_prefetch = 0 : i64, scratch_operands = 0 : i64, tpu.core_type = #tpu.core_type<tc>, window_params = [{transform_indices = @transform_0, window_bounds = array<i64: 1, 128, 32>}, {pipeline_mode = #tpu.pipeline_mode<synchronous>, transform_indices = @transform_1, window_bounds = array<i64: 32, 32>}, {pipeline_mode = #tpu.pipeline_mode<synchronous>, transform_indices = @transform_2, window_bounds = array<i64: 32, 32>}, {pipeline_mode = #tpu.pipeline_mode<synchronous>, transform_indices = @transform_3, window_bounds = array<i64: 32, 32>}, {pipeline_mode = #tpu.pipeline_mode<synchronous>, transform_indices = @transform_4, window_bounds = array<i64: 1, 32>}, {pipeline_mode = #tpu.pipeline_mode<synchronous>, transform_indices = @transform_5, window_bounds = array<i64: 1, 32>}, {pipeline_mode = #tpu.pipeline_mode<synchronous>, transform_indices = @transform_6, window_bounds = array<i64: 1, 32>}, {transform_indices = @transform_7, window_bounds = array<i64: 1, 4, 128, 8>}, {transform_indices = @transform_8, window_bounds = array<i64: 1, 4, 128, 8>}, {transform_indices = @transform_9, window_bounds = array<i64: 1, 4, 128, 8>}]} {
    %c0 = arith.constant 0 : index
    %c0_0 = arith.constant 0 : index
    %c0_1 = arith.constant 0 : index
    %0 = vector.load %arg2[%c0, %c0_0, %c0_1] : memref<1x128x32xbf16, #tpu.memory_space<vmem>>, vector<1x128x32xbf16>
    %1 = vector.shape_cast %0 : vector<1x128x32xbf16> to vector<128x32xbf16>
    %c0_2 = arith.constant 0 : index
    %c0_3 = arith.constant 0 : index
    %2 = vector.load %arg3[%c0_2, %c0_3] : memref<32x32xbf16, #tpu.memory_space<vmem>>, vector<32x32xbf16>
    %cst = arith.constant dense<0.000000e+00> : vector<128x32xf32>
    %3 = tpu.matmul %1, %2, %cst {dimension_numbers = #tpu.dot_dimension_numbers<[1], [0], [0], [1], [0, 0, 1, 1], [], []>} : vector<128x32xbf16>, vector<32x32xbf16>, vector<128x32xf32> -> vector<128x32xf32>
    %c0_4 = arith.constant 0 : index
    %c0_5 = arith.constant 0 : index
    %4 = vector.load %arg6[%c0_4, %c0_5] : memref<1x32xf32, #tpu.memory_space<vmem>>, vector<1x32xf32>
    %5 = vector.broadcast %4 : vector<1x32xf32> to vector<128x32xf32>
    %6 = arith.addf %3, %5 : vector<128x32xf32>
    %cst_6 = arith.constant 0.353553385 : f32
    %7 = vector.broadcast %cst_6 : f32 to vector<128x32xf32>
    %8 = arith.mulf %6, %7 : vector<128x32xf32>
    %9 = arith.truncf %8 : vector<128x32xf32> to vector<128x32xbf16>
    %c0_7 = arith.constant 0 : index
    %c0_8 = arith.constant 0 : index
    %10 = vector.load %arg4[%c0_7, %c0_8] : memref<32x32xbf16, #tpu.memory_space<vmem>>, vector<32x32xbf16>
    %cst_9 = arith.constant dense<0.000000e+00> : vector<128x32xf32>
    %11 = tpu.matmul %1, %10, %cst_9 {dimension_numbers = #tpu.dot_dimension_numbers<[1], [0], [0], [1], [0, 0, 1, 1], [], []>} : vector<128x32xbf16>, vector<32x32xbf16>, vector<128x32xf32> -> vector<128x32xf32>
    %c0_10 = arith.constant 0 : index
    %c0_11 = arith.constant 0 : index
    %12 = vector.load %arg7[%c0_10, %c0_11] : memref<1x32xf32, #tpu.memory_space<vmem>>, vector<1x32xf32>
    %13 = vector.broadcast %12 : vector<1x32xf32> to vector<128x32xf32>
    %14 = arith.addf %11, %13 : vector<128x32xf32>
    %15 = arith.truncf %14 : vector<128x32xf32> to vector<128x32xbf16>
    %c0_12 = arith.constant 0 : index
    %c0_13 = arith.constant 0 : index
    %16 = vector.load %arg5[%c0_12, %c0_13] : memref<32x32xbf16, #tpu.memory_space<vmem>>, vector<32x32xbf16>
    %cst_14 = arith.constant dense<0.000000e+00> : vector<128x32xf32>
    %17 = tpu.matmul %1, %16, %cst_14 {dimension_numbers = #tpu.dot_dimension_numbers<[1], [0], [0], [1], [0, 0, 1, 1], [], []>} : vector<128x32xbf16>, vector<32x32xbf16>, vector<128x32xf32> -> vector<128x32xf32>
    %c0_15 = arith.constant 0 : index
    %c0_16 = arith.constant 0 : index
    %18 = vector.load %arg8[%c0_15, %c0_16] : memref<1x32xf32, #tpu.memory_space<vmem>>, vector<1x32xf32>
    %19 = vector.broadcast %18 : vector<1x32xf32> to vector<128x32xf32>
    %20 = arith.addf %17, %19 : vector<128x32xf32>
    %21 = arith.truncf %20 : vector<128x32xf32> to vector<128x32xbf16>
    %22 = vector.extract_strided_slice %9 {offsets = [0, 0], sizes = [128, 8], strides = [1, 1]} : vector<128x32xbf16> to vector<128x8xbf16>
    %c0_17 = arith.constant 0 : index
    %c0_18 = arith.constant 0 : index
    %c0_19 = arith.constant 0 : index
    %c0_20 = arith.constant 0 : index
    %23 = vector.load %arg9[%c0_17, %c0_18, %c0_19, %c0_20] : memref<1x4x128x8xbf16, #tpu.memory_space<vmem>>, vector<1x1x128x8xbf16>
    %24 = vector.shape_cast %23 : vector<1x1x128x8xbf16> to vector<128x8xbf16>
    %25 = vector.shape_cast %22 : vector<128x8xbf16> to vector<1x1x128x8xbf16>
    tpu.vector_store %arg9[%c0_17, %c0_18, %c0_19, %c0_20], %25 {strides = array<i32>} : memref<1x4x128x8xbf16, #tpu.memory_space<vmem>>, vector<1x1x128x8xbf16>,
    %26 = vector.extract_strided_slice %15 {offsets = [0, 0], sizes = [128, 8], strides = [1, 1]} : vector<128x32xbf16> to vector<128x8xbf16>
    %c0_21 = arith.constant 0 : index
    %c0_22 = arith.constant 0 : index
    %c0_23 = arith.constant 0 : index
    %c0_24 = arith.constant 0 : index
    %27 = vector.load %arg10[%c0_21, %c0_22, %c0_23, %c0_24] : memref<1x4x128x8xbf16, #tpu.memory_space<vmem>>, vector<1x1x128x8xbf16>
    %28 = vector.shape_cast %27 : vector<1x1x128x8xbf16> to vector<128x8xbf16>
    %29 = vector.shape_cast %26 : vector<128x8xbf16> to vector<1x1x128x8xbf16>
    tpu.vector_store %arg10[%c0_21, %c0_22, %c0_23, %c0_24], %29 {strides = array<i32>} : memref<1x4x128x8xbf16, #tpu.memory_space<vmem>>, vector<1x1x128x8xbf16>,
    %30 = vector.extract_strided_slice %21 {offsets = [0, 0], sizes = [128, 8], strides = [1, 1]} : vector<128x32xbf16> to vector<128x8xbf16>
    %c0_25 = arith.constant 0 : index
    %c0_26 = arith.constant 0 : index
    %c0_27 = arith.constant 0 : index
    %c0_28 = arith.constant 0 : index
    %31 = vector.load %arg11[%c0_25, %c0_26, %c0_27, %c0_28] : memref<1x4x128x8xbf16, #tpu.memory_space<vmem>>, vector<1x1x128x8xbf16>
    %32 = vector.shape_cast %31 : vector<1x1x128x8xbf16> to vector<128x8xbf16>
    %33 = vector.shape_cast %30 : vector<128x8xbf16> to vector<1x1x128x8xbf16>
    tpu.vector_store %arg11[%c0_25, %c0_26, %c0_27, %c0_28], %33 {strides = array<i32>} : memref<1x4x128x8xbf16, #tpu.memory_space<vmem>>, vector<1x1x128x8xbf16>,
    %34 = vector.extract_strided_slice %9 {offsets = [0, 8], sizes = [128, 8], strides = [1, 1]} : vector<128x32xbf16> to vector<128x8xbf16>
    %c0_29 = arith.constant 0 : index
    %c1 = arith.constant 1 : index
    %c0_30 = arith.constant 0 : index
    %c0_31 = arith.constant 0 : index
    %35 = vector.load %arg9[%c0_29, %c1, %c0_30, %c0_31] : memref<1x4x128x8xbf16, #tpu.memory_space<vmem>>, vector<1x1x128x8xbf16>
    %36 = vector.shape_cast %35 : vector<1x1x128x8xbf16> to vector<128x8xbf16>
    %37 = vector.shape_cast %34 : vector<128x8xbf16> to vector<1x1x128x8xbf16>
    tpu.vector_store %arg9[%c0_29, %c1, %c0_30, %c0_31], %37 {strides = array<i32>} : memref<1x4x128x8xbf16, #tpu.memory_space<vmem>>, vector<1x1x128x8xbf16>,
    %38 = vector.extract_strided_slice %15 {offsets = [0, 8], sizes = [128, 8], strides = [1, 1]} : vector<128x32xbf16> to vector<128x8xbf16>
    %c0_32 = arith.constant 0 : index
    %c1_33 = arith.constant 1 : index
    %c0_34 = arith.constant 0 : index
    %c0_35 = arith.constant 0 : index
    %39 = vector.load %arg10[%c0_32, %c1_33, %c0_34, %c0_35] : memref<1x4x128x8xbf16, #tpu.memory_space<vmem>>, vector<1x1x128x8xbf16>
    %40 = vector.shape_cast %39 : vector<1x1x128x8xbf16> to vector<128x8xbf16>
    %41 = vector.shape_cast %38 : vector<128x8xbf16> to vector<1x1x128x8xbf16>
    tpu.vector_store %arg10[%c0_32, %c1_33, %c0_34, %c0_35], %41 {strides = array<i32>} : memref<1x4x128x8xbf16, #tpu.memory_space<vmem>>, vector<1x1x128x8xbf16>,
    %42 = vector.extract_strided_slice %21 {offsets = [0, 8], sizes = [128, 8], strides = [1, 1]} : vector<128x32xbf16> to vector<128x8xbf16>
    %c0_36 = arith.constant 0 : index
    %c1_37 = arith.constant 1 : index
    %c0_38 = arith.constant 0 : index
    %c0_39 = arith.constant 0 : index
    %43 = vector.load %arg11[%c0_36, %c1_37, %c0_38, %c0_39] : memref<1x4x128x8xbf16, #tpu.memory_space<vmem>>, vector<1x1x128x8xbf16>
    %44 = vector.shape_cast %43 : vector<1x1x128x8xbf16> to vector<128x8xbf16>
    %45 = vector.shape_cast %42 : vector<128x8xbf16> to vector<1x1x128x8xbf16>
    tpu.vector_store %arg11[%c0_36, %c1_37, %c0_38, %c0_39], %45 {strides = array<i32>} : memref<1x4x128x8xbf16, #tpu.memory_space<vmem>>, vector<1x1x128x8xbf16>,
    %46 = vector.extract_strided_slice %9 {offsets = [0, 16], sizes = [128, 8], strides = [1, 1]} : vector<128x32xbf16> to vector<128x8xbf16>
    %c0_40 = arith.constant 0 : index
    %c2 = arith.constant 2 : index
    %c0_41 = arith.constant 0 : index
    %c0_42 = arith.constant 0 : index
    %47 = vector.load %arg9[%c0_40, %c2, %c0_41, %c0_42] : memref<1x4x128x8xbf16, #tpu.memory_space<vmem>>, vector<1x1x128x8xbf16>
    %48 = vector.shape_cast %47 : vector<1x1x128x8xbf16> to vector<128x8xbf16>
    %49 = vector.shape_cast %46 : vector<128x8xbf16> to vector<1x1x128x8xbf16>
    tpu.vector_store %arg9[%c0_40, %c2, %c0_41, %c0_42], %49 {strides = array<i32>} : memref<1x4x128x8xbf16, #tpu.memory_space<vmem>>, vector<1x1x128x8xbf16>,
    %50 = vector.extract_strided_slice %15 {offsets = [0, 16], sizes = [128, 8], strides = [1, 1]} : vector<128x32xbf16> to vector<128x8xbf16>
    %c0_43 = arith.constant 0 : index
    %c2_44 = arith.constant 2 : index
    %c0_45 = arith.constant 0 : index
    %c0_46 = arith.constant 0 : index
    %51 = vector.load %arg10[%c0_43, %c2_44, %c0_45, %c0_46] : memref<1x4x128x8xbf16, #tpu.memory_space<vmem>>, vector<1x1x128x8xbf16>
    %52 = vector.shape_cast %51 : vector<1x1x128x8xbf16> to vector<128x8xbf16>
    %53 = vector.shape_cast %50 : vector<128x8xbf16> to vector<1x1x128x8xbf16>
    tpu.vector_store %arg10[%c0_43, %c2_44, %c0_45, %c0_46], %53 {strides = array<i32>} : memref<1x4x128x8xbf16, #tpu.memory_space<vmem>>, vector<1x1x128x8xbf16>,
    %54 = vector.extract_strided_slice %21 {offsets = [0, 16], sizes = [128, 8], strides = [1, 1]} : vector<128x32xbf16> to vector<128x8xbf16>
    %c0_47 = arith.constant 0 : index
    %c2_48 = arith.constant 2 : index
    %c0_49 = arith.constant 0 : index
    %c0_50 = arith.constant 0 : index
    %55 = vector.load %arg11[%c0_47, %c2_48, %c0_49, %c0_50] : memref<1x4x128x8xbf16, #tpu.memory_space<vmem>>, vector<1x1x128x8xbf16>
    %56 = vector.shape_cast %55 : vector<1x1x128x8xbf16> to vector<128x8xbf16>
    %57 = vector.shape_cast %54 : vector<128x8xbf16> to vector<1x1x128x8xbf16>
    tpu.vector_store %arg11[%c0_47, %c2_48, %c0_49, %c0_50], %57 {strides = array<i32>} : memref<1x4x128x8xbf16, #tpu.memory_space<vmem>>, vector<1x1x128x8xbf16>,
    %58 = vector.extract_strided_slice %9 {offsets = [0, 24], sizes = [128, 8], strides = [1, 1]} : vector<128x32xbf16> to vector<128x8xbf16>
    %c0_51 = arith.constant 0 : index
    %c3 = arith.constant 3 : index
    %c0_52 = arith.constant 0 : index
    %c0_53 = arith.constant 0 : index
    %59 = vector.load %arg9[%c0_51, %c3, %c0_52, %c0_53] : memref<1x4x128x8xbf16, #tpu.memory_space<vmem>>, vector<1x1x128x8xbf16>
    %60 = vector.shape_cast %59 : vector<1x1x128x8xbf16> to vector<128x8xbf16>
    %61 = vector.shape_cast %58 : vector<128x8xbf16> to vector<1x1x128x8xbf16>
    tpu.vector_store %arg9[%c0_51, %c3, %c0_52, %c0_53], %61 {strides = array<i32>} : memref<1x4x128x8xbf16, #tpu.memory_space<vmem>>, vector<1x1x128x8xbf16>,
    %62 = vector.extract_strided_slice %15 {offsets = [0, 24], sizes = [128, 8], strides = [1, 1]} : vector<128x32xbf16> to vector<128x8xbf16>
    %c0_54 = arith.constant 0 : index
    %c3_55 = arith.constant 3 : index
    %c0_56 = arith.constant 0 : index
    %c0_57 = arith.constant 0 : index
    %63 = vector.load %arg10[%c0_54, %c3_55, %c0_56, %c0_57] : memref<1x4x128x8xbf16, #tpu.memory_space<vmem>>, vector<1x1x128x8xbf16>
    %64 = vector.shape_cast %63 : vector<1x1x128x8xbf16> to vector<128x8xbf16>
    %65 = vector.shape_cast %62 : vector<128x8xbf16> to vector<1x1x128x8xbf16>
    tpu.vector_store %arg10[%c0_54, %c3_55, %c0_56, %c0_57], %65 {strides = array<i32>} : memref<1x4x128x8xbf16, #tpu.memory_space<vmem>>, vector<1x1x128x8xbf16>,
    %66 = vector.extract_strided_slice %21 {offsets = [0, 24], sizes = [128, 8], strides = [1, 1]} : vector<128x32xbf16> to vector<128x8xbf16>
    %c0_58 = arith.constant 0 : index
    %c3_59 = arith.constant 3 : index
    %c0_60 = arith.constant 0 : index
    %c0_61 = arith.constant 0 : index
    %67 = vector.load %arg11[%c0_58, %c3_59, %c0_60, %c0_61] : memref<1x4x128x8xbf16, #tpu.memory_space<vmem>>, vector<1x1x128x8xbf16>
    %68 = vector.shape_cast %67 : vector<1x1x128x8xbf16> to vector<128x8xbf16>
    %69 = vector.shape_cast %66 : vector<128x8xbf16> to vector<1x1x128x8xbf16>
    tpu.vector_store %arg11[%c0_58, %c3_59, %c0_60, %c0_61], %69 {strides = array<i32>} : memref<1x4x128x8xbf16, #tpu.memory_space<vmem>>, vector<1x1x128x8xbf16>,
    return
  }
  func.func @transform_0(%arg0: i32, %arg1: i32) -> (i32, i32, i32) {
    %c0_i32 = arith.constant 0 : i32
    %c0_i32_0 = arith.constant 0 : i32
    return %arg0, %arg1, %c0_i32 : i32, i32, i32
  }
  func.func @transform_1(%arg0: i32, %arg1: i32) -> (i32, i32) {
    %c0_i32 = arith.constant 0 : i32
    %c0_i32_0 = arith.constant 0 : i32
    %c0_i32_1 = arith.constant 0 : i32
    return %c0_i32, %c0_i32_0 : i32, i32
  }
  func.func @transform_2(%arg0: i32, %arg1: i32) -> (i32, i32) {
    %c0_i32 = arith.constant 0 : i32
    %c0_i32_0 = arith.constant 0 : i32
    %c0_i32_1 = arith.constant 0 : i32
    return %c0_i32, %c0_i32_0 : i32, i32
  }
  func.func @transform_3(%arg0: i32, %arg1: i32) -> (i32, i32) {
    %c0_i32 = arith.constant 0 : i32
    %c0_i32_0 = arith.constant 0 : i32
    %c0_i32_1 = arith.constant 0 : i32
    return %c0_i32, %c0_i32_0 : i32, i32
  }
  func.func @transform_4(%arg0: i32, %arg1: i32) -> (i32, i32) {
    %c0_i32 = arith.constant 0 : i32
    %c0_i32_0 = arith.constant 0 : i32
    %c0_i32_1 = arith.constant 0 : i32
    return %c0_i32, %c0_i32_0 : i32, i32
  }
  func.func @transform_5(%arg0: i32, %arg1: i32) -> (i32, i32) {
    %c0_i32 = arith.constant 0 : i32
    %c0_i32_0 = arith.constant 0 : i32
    %c0_i32_1 = arith.constant 0 : i32
    return %c0_i32, %c0_i32_0 : i32, i32
  }
  func.func @transform_6(%arg0: i32, %arg1: i32) -> (i32, i32) {
    %c0_i32 = arith.constant 0 : i32
    %c0_i32_0 = arith.constant 0 : i32
    %c0_i32_1 = arith.constant 0 : i32
    return %c0_i32, %c0_i32_0 : i32, i32
  }
  func.func @transform_7(%arg0: i32, %arg1: i32) -> (i32, i32, i32, i32) {
    %c0_i32 = arith.constant 0 : i32
    %c0_i32_0 = arith.constant 0 : i32
    %c0_i32_1 = arith.constant 0 : i32
    return %arg0, %c0_i32, %arg1, %c0_i32_0 : i32, i32, i32, i32
  }
  func.func @transform_8(%arg0: i32, %arg1: i32) -> (i32, i32, i32, i32) {
    %c0_i32 = arith.constant 0 : i32
    %c0_i32_0 = arith.constant 0 : i32
    %c0_i32_1 = arith.constant 0 : i32
    return %arg0, %c0_i32, %arg1, %c0_i32_0 : i32, i32, i32, i32
  }
  func.func @transform_9(%arg0: i32, %arg1: i32) -> (i32, i32, i32, i32) {
    %c0_i32 = arith.constant 0 : i32
    %c0_i32_0 = arith.constant 0 : i32
    %c0_i32_1 = arith.constant 0 : i32
    return %arg0, %c0_i32, %arg1, %c0_i32_0 : i32, i32, i32, i32
  }
}

</mosaic_0001>

<llo_original>
// kernel: tpu_custom_call.1
$region0: #{tpu_custom_call.1}
  #allocation0 [shape = 'u32[]', space=smem, size = 0x4, offset = 0x4, fixed_abs, tag = 'smem constant byte address 0x4 - core index']
  #allocation1 [shape = 'u32[144,128]{1,0:T(1,128)}', space=vmem, size = 0x12000, scoped, tag = 'internal scratch']
  %s0 = inlined_call_operand.vmem [shape: bf16[2,128,32], index: 0, kind: input, shape index: {}]
  %s1 = inlined_call_operand.vmem [shape: bf16[32,32], index: 1, kind: input, shape index: {}]
  %s2 = inlined_call_operand.vmem [shape: bf16[32,32], index: 2, kind: input, shape index: {}]
  %s3 = inlined_call_operand.vmem [shape: bf16[32,32], index: 3, kind: input, shape index: {}]
  %s4 = inlined_call_operand.vmem [shape: f32[1,32], index: 4, kind: input, shape index: {}]
  %s5 = inlined_call_operand.vmem [shape: f32[1,32], index: 5, kind: input, shape index: {}]
  %s6 = inlined_call_operand.vmem [shape: f32[1,32], index: 6, kind: input, shape index: {}]
  %s7 = inlined_call_operand.vmem [shape: bf16[2,4,128,8], index: 7, kind: output, shape index: {0}]
  %s8 = inlined_call_operand.vmem [shape: bf16[2,4,128,8], index: 8, kind: output, shape index: {1}]
  %s9 = inlined_call_operand.vmem [shape: bf16[2,4,128,8], index: 9, kind: output, shape index: {2}]
  %10 = xla_tuple %s7, %s8, %s9
  %s11 = sld [smem:[#allocation0]]
  $region77: #{tpu_custom_call.1} parent=0
    _
  %s13 = ssub.s32 1, %s11
  %s14 = scalar_select 0, %s13, %s11
  loop: start=0, step=1, limit=4
  $region2: #{tpu_custom_call.1} parent=0 // loop_pre_header
    _
  $region3: #{tpu_custom_call.1} parent=0 // loop_header
    %s16 = sphi 0, %s20
    %p17 = scmp.ge.s32.totalorder %s16, 4
    %s23 = sphi 0, %s35
    %s24 = sphi 0, %s31
    %s25 = sphi 0, %s23
    %s26 = sphi 0, %s24
    %s27 = sphi 0, %s25
    %s28 = sphi 0, %s26
    %s40 = sphi 0, %s42
    %s43 = sphi 0, %s40
    %s44 = sphi 0, %s43
    %s60 = sphi 0, %s44
    %s64 = sphi 0, %s64
    %s66 = sphi 0, %s64
    %s67 = sphi 0, %s66
    %s81 = sphi 0, %s67
    %s85 = sphi 0, %s85
    %s87 = sphi 0, %s85
    %s88 = sphi 0, %s87
    %s102 = sphi 0, %s88
    %s106 = sphi 0, %s106
    %s108 = sphi 0, %s106
    %s109 = sphi 0, %s108
    %s123 = sphi 0, %s109
    %s127 = sphi 0, %s127
    %s129 = sphi 0, %s127
    %s130 = sphi 0, %s129
    %s144 = sphi 0, %s130
    %s148 = sphi 0, %s148
    %s150 = sphi 0, %s148
    %s151 = sphi 0, %s150
    %s165 = sphi 0, %s151
    %s169 = sphi 0, %s169
    %s171 = sphi 0, %s169
    %s172 = sphi 0, %s171
    %s186 = sphi 0, %s172
    %s194 = sphi 0, %s196
    %s197 = sphi 0, %s194
    %s198 = sphi 0, %s197
    %s214 = sphi 0, %s198
    %s222 = sphi 0, %s224
    %s225 = sphi 0, %s222
    %s226 = sphi 0, %s225
    %s242 = sphi 0, %s226
    %s250 = sphi 0, %s252
    %s253 = sphi 0, %s250
    %s254 = sphi 0, %s253
    %s270 = sphi 0, %s254
  $region4: #{tpu_custom_call.1} parent=0 // loop_header_branch
    %19 = sbr.rel (%p17) target = $region8
  $region5: #{tpu_custom_call.1} parent=0 // loop_body
    %s21 = ssub.s32 %s16, 1
    %s22 = ssub.s32 %s16, 2
    %s29 = sadd.s32 1, %s24
    %p30 = scmp.ge.s32.totalorder %s29, 1
    %s31 = scalar_select %p30, 0, %s29
    %s32 = sadd.s32 1, %s23
    %s33 = scalar_select %p30, %s32, %s23
    %p34 = scmp.ge.s32.totalorder %s33, 2
    %s35 = scalar_select %p34, 0, %s33
    %s36 = ssub.s32 %s23, %s35
    %s37 = ssub.s32 %s24, %s31
    %s38 = sor.u32 %s36, %s37
    %p39 = scmp.eq.s32.totalorder %s38, 0
    %s41 = sadd.s32 %s40, 1
    %s42 = scalar_select %p39, %s40, %s41
    %p45 = pneg %p39
    %p46 = scmp.eq.s32.totalorder %s16, 1
    %p47 = por %p45, %p46
    %p48 = scmp.ne.s32.totalorder %s40, %s43
    %p49 = scmp.eq.s32.totalorder %s16, 0
    %p50 = por %p48, %p49
    %p51 = scmp.ne.s32.totalorder %s40, %s43
    %p52 = scmp.eq.s32.totalorder %s21, 1
    %p53 = por %p51, %p52
    %p54 = scmp.ne.s32.totalorder %s43, %s44
    %p55 = scmp.eq.s32.totalorder %s21, 0
    %p56 = por %p54, %p55
    %p57 = scmp.ne.s32.totalorder %s43, %s44
    %p58 = scmp.eq.s32.totalorder %s22, 1
    %p59 = por %p57, %p58
    %p61 = scmp.ne.s32.totalorder %s44, %s60
    %p62 = scmp.eq.s32.totalorder %s22, 0
    %p63 = por %p61, %p62
    %s65 = sadd.s32 %s64, 1
    %p68 = scmp.eq.s32.totalorder %s16, 1
    %p69 = scmp.ne.s32.totalorder %s64, %s66
    %p70 = scmp.eq.s32.totalorder %s16, 0
    %p71 = por %p69, %p70
    %p72 = scmp.ne.s32.totalorder %s64, %s66
    %p73 = scmp.eq.s32.totalorder %s21, 1
    %p74 = por %p72, %p73
    %p75 = scmp.ne.s32.totalorder %s66, %s67
    %p76 = scmp.eq.s32.totalorder %s21, 0
    %p77 = por %p75, %p76
    %p78 = scmp.ne.s32.totalorder %s66, %s67
    %p79 = scmp.eq.s32.totalorder %s22, 1
    %p80 = por %p78, %p79
    %p82 = scmp.ne.s32.totalorder %s67, %s81
    %p83 = scmp.eq.s32.totalorder %s22, 0
    %p84 = por %p82, %p83
    %s86 = sadd.s32 %s85, 1
    %p89 = scmp.eq.s32.totalorder %s16, 1
    %p90 = scmp.ne.s32.totalorder %s85, %s87
    %p91 = scmp.eq.s32.totalorder %s16, 0
    %p92 = por %p90, %p91
    %p93 = scmp.ne.s32.totalorder %s85, %s87
    %p94 = scmp.eq.s32.totalorder %s21, 1
    %p95 = por %p93, %p94
    %p96 = scmp.ne.s32.totalorder %s87, %s88
    %p97 = scmp.eq.s32.totalorder %s21, 0
    %p98 = por %p96, %p97
    %p99 = scmp.ne.s32.totalorder %s87, %s88
    %p100 = scmp.eq.s32.totalorder %s22, 1
    %p101 = por %p99, %p100
    %p103 = scmp.ne.s32.totalorder %s88, %s102
    %p104 = scmp.eq.s32.totalorder %s22, 0
    %p105 = por %p103, %p104
    %s107 = sadd.s32 %s106, 1
    %p110 = scmp.eq.s32.totalorder %s16, 1
    %p111 = scmp.ne.s32.totalorder %s106, %s108
    %p112 = scmp.eq.s32.totalorder %s16, 0
    %p113 = por %p111, %p112
    %p114 = scmp.ne.s32.totalorder %s106, %s108
    %p115 = scmp.eq.s32.totalorder %s21, 1
    %p116 = por %p114, %p115
    %p117 = scmp.ne.s32.totalorder %s108, %s109
    %p118 = scmp.eq.s32.totalorder %s21, 0
    %p119 = por %p117, %p118
    %p120 = scmp.ne.s32.totalorder %s108, %s109
    %p121 = scmp.eq.s32.totalorder %s22, 1
    %p122 = por %p120, %p121
    %p124 = scmp.ne.s32.totalorder %s109, %s123
    %p125 = scmp.eq.s32.totalorder %s22, 0
    %p126 = por %p124, %p125
    %s128 = sadd.s32 %s127, 1
    %p131 = scmp.eq.s32.totalorder %s16, 1
    %p132 = scmp.ne.s32.totalorder %s127, %s129
    %p133 = scmp.eq.s32.totalorder %s16, 0
    %p134 = por %p132, %p133
    %p135 = scmp.ne.s32.totalorder %s127, %s129
    %p136 = scmp.eq.s32.totalorder %s21, 1
    %p137 = por %p135, %p136
    %p138 = scmp.ne.s32.totalorder %s129, %s130
    %p139 = scmp.eq.s32.totalorder %s21, 0
    %p140 = por %p138, %p139
    %p141 = scmp.ne.s32.totalorder %s129, %s130
    %p142 = scmp.eq.s32.totalorder %s22, 1
    %p143 = por %p141, %p142
    %p145 = scmp.ne.s32.totalorder %s130, %s144
    %p146 = scmp.eq.s32.totalorder %s22, 0
    %p147 = por %p145, %p146
    %s149 = sadd.s32 %s148, 1
    %p152 = scmp.eq.s32.totalorder %s16, 1
    %p153 = scmp.ne.s32.totalorder %s148, %s150
    %p154 = scmp.eq.s32.totalorder %s16, 0
    %p155 = por %p153, %p154
    %p156 = scmp.ne.s32.totalorder %s148, %s150
    %p157 = scmp.eq.s32.totalorder %s21, 1
    %p158 = por %p156, %p157
    %p159 = scmp.ne.s32.totalorder %s150, %s151
    %p160 = scmp.eq.s32.totalorder %s21, 0
    %p161 = por %p159, %p160
    %p162 = scmp.ne.s32.totalorder %s150, %s151
    %p163 = scmp.eq.s32.totalorder %s22, 1
    %p164 = por %p162, %p163
    %p166 = scmp.ne.s32.totalorder %s151, %s165
    %p167 = scmp.eq.s32.totalorder %s22, 0
    %p168 = por %p166, %p167
    %s170 = sadd.s32 %s169, 1
    %p173 = scmp.eq.s32.totalorder %s16, 1
    %p174 = scmp.ne.s32.totalorder %s169, %s171
    %p175 = scmp.eq.s32.totalorder %s16, 0
    %p176 = por %p174, %p175
    %p177 = scmp.ne.s32.totalorder %s169, %s171
    %p178 = scmp.eq.s32.totalorder %s21, 1
    %p179 = por %p177, %p178
    %p180 = scmp.ne.s32.totalorder %s171, %s172
    %p181 = scmp.eq.s32.totalorder %s21, 0
    %p182 = por %p180, %p181
    %p183 = scmp.ne.s32.totalorder %s171, %s172
    %p184 = scmp.eq.s32.totalorder %s22, 1
    %p185 = por %p183, %p184
    %p187 = scmp.ne.s32.totalorder %s172, %s186
    %p188 = scmp.eq.s32.totalorder %s22, 0
    %p189 = por %p187, %p188
    %s190 = ssub.s32 %s23, %s35
    %s191 = ssub.s32 %s24, %s31
    %s192 = sor.u32 %s190, %s191
    %p193 = scmp.eq.s32.totalorder %s192, 0
    %s195 = sadd.s32 %s194, 1
    %s196 = scalar_select %p193, %s194, %s195
    %p199 = pneg %p193
    %p200 = scmp.eq.s32.totalorder %s16, 1
    %p201 = por %p199, %p200
    %p202 = scmp.ne.s32.totalorder %s194, %s197
    %p203 = scmp.eq.s32.totalorder %s16, 0
    %p204 = por %p202, %p203
    %p205 = scmp.ne.s32.totalorder %s194, %s197
    %p206 = scmp.eq.s32.totalorder %s21, 1
    %p207 = por %p205, %p206
    %p208 = scmp.ne.s32.totalorder %s197, %s198
    %p209 = scmp.eq.s32.totalorder %s21, 0
    %p210 = por %p208, %p209
    %p211 = scmp.ne.s32.totalorder %s197, %s198
    %p212 = scmp.eq.s32.totalorder %s22, 1
    %p213 = por %p211, %p212
    %p215 = scmp.ne.s32.totalorder %s198, %s214
    %p216 = scmp.eq.s32.totalorder %s22, 0
    %p217 = por %p215, %p216
    %s218 = ssub.s32 %s23, %s35
    %s219 = ssub.s32 %s24, %s31
    %s220 = sor.u32 %s218, %s219
    %p221 = scmp.eq.s32.totalorder %s220, 0
    %s223 = sadd.s32 %s222, 1
    %s224 = scalar_select %p221, %s222, %s223
    %p227 = pneg %p221
    %p228 = scmp.eq.s32.totalorder %s16, 1
    %p229 = por %p227, %p228
    %p230 = scmp.ne.s32.totalorder %s222, %s225
    %p231 = scmp.eq.s32.totalorder %s16, 0
    %p232 = por %p230, %p231
    %p233 = scmp.ne.s32.totalorder %s222, %s225
    %p234 = scmp.eq.s32.totalorder %s21, 1
    %p235 = por %p233, %p234
    %p236 = scmp.ne.s32.totalorder %s225, %s226
    %p237 = scmp.eq.s32.totalorder %s21, 0
    %p238 = por %p236, %p237
    %p239 = scmp.ne.s32.totalorder %s225, %s226
    %p240 = scmp.eq.s32.totalorder %s22, 1
    %p241 = por %p239, %p240
    %p243 = scmp.ne.s32.totalorder %s226, %s242
    %p244 = scmp.eq.s32.totalorder %s22, 0
    %p245 = por %p243, %p244
    %s246 = ssub.s32 %s23, %s35
    %s247 = ssub.s32 %s24, %s31
    %s248 = sor.u32 %s246, %s247
    %p249 = scmp.eq.s32.totalorder %s248, 0
    %s251 = sadd.s32 %s250, 1
    %s252 = scalar_select %p249, %s250, %s251
    %p255 = pneg %p249
    %p256 = scmp.eq.s32.totalorder %s16, 1
    %p257 = por %p255, %p256
    %p258 = scmp.ne.s32.totalorder %s250, %s253
    %p259 = scmp.eq.s32.totalorder %s16, 0
    %p260 = por %p258, %p259
    %p261 = scmp.ne.s32.totalorder %s250, %s253
    %p262 = scmp.eq.s32.totalorder %s21, 1
    %p263 = por %p261, %p262
    %p264 = scmp.ne.s32.totalorder %s253, %s254
    %p265 = scmp.eq.s32.totalorder %s21, 0
    %p266 = por %p264, %p265
    %p267 = scmp.ne.s32.totalorder %s253, %s254
    %p268 = scmp.eq.s32.totalorder %s22, 1
    %p269 = por %p267, %p268
    %p271 = scmp.ne.s32.totalorder %s254, %s270
    %p272 = scmp.eq.s32.totalorder %s22, 0
    %p273 = por %p271, %p272
    %p274 = scmp.le.s32.totalorder 1, %s16
    %p275 = scmp.lt.s32.totalorder %s16, 3
    %p276 = pnand %p274, %p275
    %p277 = pneg %p276
    // Predicated region
    $region9: #{tpu_custom_call.1} parent=5 // pred_check
      _
    $region10: #{tpu_custom_call.1} parent=5 // pred_check_branch
      %279 = sbr.rel (%p276) target = $region12
    $region11: #{tpu_custom_call.1} parent=5 // pred_region
      %s280 = ssub.s32 %s16, 1
      // Predicated region
      $region13: #{tpu_custom_call.1} parent=11 // pred_check
        %p281 = pneg %p77
      $region14: #{tpu_custom_call.1} parent=11 // pred_check_branch
        %283 = sbr.rel (%p281) target = $region16
      $region15: #{tpu_custom_call.1} parent=11 // pred_region
        _
      $region16: #{tpu_custom_call.1} parent=11 // pred_fallthru
        _
      // Predicated region
      $region17: #{tpu_custom_call.1} parent=11 // pred_check
        %p284 = pneg %p98
      $region18: #{tpu_custom_call.1} parent=11 // pred_check_branch
        %286 = sbr.rel (%p284) target = $region20
      $region19: #{tpu_custom_call.1} parent=11 // pred_region
        _
      $region20: #{tpu_custom_call.1} parent=11 // pred_fallthru
        _
      // Predicated region
      $region21: #{tpu_custom_call.1} parent=11 // pred_check
        %p287 = pneg %p119
      $region22: #{tpu_custom_call.1} parent=11 // pred_check_branch
        %289 = sbr.rel (%p287) target = $region24
      $region23: #{tpu_custom_call.1} parent=11 // pred_region
        _
      $region24: #{tpu_custom_call.1} parent=11 // pred_fallthru
        _
      // Predicated region
      $region25: #{tpu_custom_call.1} parent=11 // pred_check
        %p290 = pneg %p140
      $region26: #{tpu_custom_call.1} parent=11 // pred_check_branch
        %292 = sbr.rel (%p290) target = $region28
      $region27: #{tpu_custom_call.1} parent=11 // pred_region
        _
      $region28: #{tpu_custom_call.1} parent=11 // pred_fallthru
        _
      // Predicated region
      $region29: #{tpu_custom_call.1} parent=11 // pred_check
        %p293 = pneg %p161
      $region30: #{tpu_custom_call.1} parent=11 // pred_check_branch
        %295 = sbr.rel (%p293) target = $region32
      $region31: #{tpu_custom_call.1} parent=11 // pred_region
        _
      $region32: #{tpu_custom_call.1} parent=11 // pred_fallthru
        _
      // Predicated region
      $region33: #{tpu_custom_call.1} parent=11 // pred_check
        %p296 = pneg %p182
      $region34: #{tpu_custom_call.1} parent=11 // pred_check_branch
        %298 = sbr.rel (%p296) target = $region36
      $region35: #{tpu_custom_call.1} parent=11 // pred_region
        _
      $region36: #{tpu_custom_call.1} parent=11 // pred_fallthru
        _
    $region12: #{tpu_custom_call.1} parent=5 // pred_fallthru
      _
    %p299 = scmp.lt.s32.totalorder %s16, 2
    // Predicated region
    $region37: #{tpu_custom_call.1} parent=5 // pred_check
      %p300 = pneg %p299
    $region38: #{tpu_custom_call.1} parent=5 // pred_check_branch
      %302 = sbr.rel (%p300) target = $region40
    $region39: #{tpu_custom_call.1} parent=5 // pred_region
      // Predicated region
      $region41: #{tpu_custom_call.1} parent=39 // pred_check
        %p303 = pneg %p50
      $region42: #{tpu_custom_call.1} parent=39 // pred_check_branch
        %305 = sbr.rel (%p303) target = $region44
      $region43: #{tpu_custom_call.1} parent=39 // pred_region
        %s306 = smul.u32 16, %s24
        %p307 = scmp.lt.s32.totalorder %s23, 1
        %s308 = scalar_select %p307, %s23, 1
        %p309 = scmp.lt.s32.totalorder %s306, 15
        %s310 = scalar_select %p309, %s306, 15
        %s311 = smul.addr %s308, 16
        %s312 = sadd.s32 %s310, %s311
        %s313 = smul.addr %s312, 4
        %s314 = scalar_lea.vmem %s0, %s313
        %s315 = smul.u32 16, %s24
      $region44: #{tpu_custom_call.1} parent=39 // pred_fallthru
        _
    $region40: #{tpu_custom_call.1} parent=5 // pred_fallthru
      _
    %p316 = scmp.le.s32.totalorder 1, %s16
    %p317 = scmp.lt.s32.totalorder %s16, 3
    %p318 = pnand %p316, %p317
    %p319 = pneg %p318
    // Predicated region
    $region45: #{tpu_custom_call.1} parent=5 // pred_check
      _
    $region46: #{tpu_custom_call.1} parent=5 // pred_check_branch
      %321 = sbr.rel (%p318) target = $region48
    $region47: #{tpu_custom_call.1} parent=5 // pred_region
      %s322 = ssub.s32 %s16, 1
      %s323 = smul.u32 16, %s26
      %p324 = scmp.lt.s32.totalorder %s25, 1
      %s325 = scalar_select %p324, %s25, 1
      %p326 = scmp.lt.s32.totalorder %s323, 15
      %s327 = scalar_select %p326, %s323, 15
      %s328 = smul.addr %s325, 16
      %s329 = sadd.s32 %s327, %s328
      %s330 = smul.addr %s329, 4
      %s331 = scalar_lea.vmem %s0, %s330
      %p332 = pneg %p56
      %p333 = pneg %p53
      %p334 = pneg %p77
      %p335 = pneg %p74
      %p336 = pneg %p98
      %p337 = pneg %p95
      %p338 = pneg %p119
      %p339 = pneg %p116
      %p340 = pneg %p140
      %p341 = pneg %p137
      %p342 = pneg %p161
      %p343 = pneg %p158
      %p344 = pneg %p182
      %p345 = pneg %p179
      %p346 = pneg %p210
      %p347 = pneg %p207
      %s348 = smul.u32 16, %s26
      %p349 = scmp.lt.s32.totalorder %s25, 1
      %s350 = scalar_select %p349, %s25, 1
      %p351 = scmp.lt.s32.totalorder %s348, 15
      %s352 = scalar_select %p351, %s348, 15
      %s353 = smul.addr %s350, 64
      %s354 = sadd.s32 %s352, %s353
      %s355 = smul.addr %s354, 4
      %s356 = scalar_lea.vmem %s7, %s355
      %p357 = pneg %p238
      %p358 = pneg %p235
      %s359 = smul.u32 16, %s26
      %p360 = scmp.lt.s32.totalorder %s25, 1
      %s361 = scalar_select %p360, %s25, 1
      %p362 = scmp.lt.s32.totalorder %s359, 15
      %s363 = scalar_select %p362, %s359, 15
      %s364 = smul.addr %s361, 64
      %s365 = sadd.s32 %s363, %s364
      %s366 = smul.addr %s365, 4
      %s367 = scalar_lea.vmem %s8, %s366
      %p368 = pneg %p266
      %p369 = pneg %p263
      %s370 = smul.u32 16, %s26
      %p371 = scmp.lt.s32.totalorder %s25, 1
      %s372 = scalar_select %p371, %s25, 1
      %p373 = scmp.lt.s32.totalorder %s370, 15
      %s374 = scalar_select %p373, %s370, 15
      %s375 = smul.addr %s372, 64
      %s376 = sadd.s32 %s374, %s375
      %s377 = smul.addr %s376, 4
      %s378 = scalar_lea.vmem %s9, %s377
      %s379 = smul.u32 16, %s26
      %p380 = scmp.lt.s32.totalorder %s25, 1
      %s381 = scalar_select %p380, %s25, 1
      %p382 = scmp.lt.s32.totalorder %s379, 15
      %s383 = scalar_select %p382, %s379, 15
      %s384 = smul.addr %s381, 16
      %s385 = sadd.s32 %s383, %s384
      %s386 = smul.addr %s385, 4
      %s387 = scalar_lea.vmem %s0, %s386
      %s388 = smul.u32 16, %s26
      %s389 = smul.u32 16, %s26
      %p390 = scmp.lt.s32.totalorder %s25, 1
      %s391 = scalar_select %p390, %s25, 1
      %p392 = scmp.lt.s32.totalorder %s389, 15
      %s393 = scalar_select %p392, %s389, 15
      %s394 = smul.addr %s391, 64
      %s395 = sadd.s32 %s393, %s394
      %s396 = smul.addr %s395, 4
      %s397 = scalar_lea.vmem %s7, %s396
      %s398 = smul.u32 16, %s26
      %s399 = smul.u32 16, %s26
      %p400 = scmp.lt.s32.totalorder %s25, 1
      %s401 = scalar_select %p400, %s25, 1
      %p402 = scmp.lt.s32.totalorder %s399, 15
      %s403 = scalar_select %p402, %s399, 15
      %s404 = smul.addr %s401, 64
      %s405 = sadd.s32 %s403, %s404
      %s406 = smul.addr %s405, 4
      %s407 = scalar_lea.vmem %s8, %s406
      %s408 = smul.u32 16, %s26
      %s409 = smul.u32 16, %s26
      %p410 = scmp.lt.s32.totalorder %s25, 1
      %s411 = scalar_select %p410, %s25, 1
      %p412 = scmp.lt.s32.totalorder %s409, 15
      %s413 = scalar_select %p412, %s409, 15
      %s414 = smul.addr %s411, 64
      %s415 = sadd.s32 %s413, %s414
      %s416 = smul.addr %s415, 4
      %s417 = scalar_lea.vmem %s9, %s416
      %s418 = smul.u32 16, %s26
      %v420 = vld [vmem:[%s387] sm:$0xf]
      %v421 = vld [vmem:[%s387 + $0x4] sm:$0xf]
      %v422 = vld [vmem:[%s387 + $0x8] sm:$0xf]
      %v423 = vld [vmem:[%s387 + $0xc] sm:$0xf]
      %v424 = vld [vmem:[%s387 + $0x10] sm:$0xf]
      %v425 = vld [vmem:[%s387 + $0x14] sm:$0xf]
      %v426 = vld [vmem:[%s387 + $0x18] sm:$0xf]
      %v427 = vld [vmem:[%s387 + $0x1c] sm:$0xf]
      %v428 = vld [vmem:[%s387 + $0x20] sm:$0xf]
      %v429 = vld [vmem:[%s387 + $0x24] sm:$0xf]
      %v430 = vld [vmem:[%s387 + $0x28] sm:$0xf]
      %v431 = vld [vmem:[%s387 + $0x2c] sm:$0xf]
      %v432 = vld [vmem:[%s387 + $0x30] sm:$0xf]
      %v433 = vld [vmem:[%s387 + $0x34] sm:$0xf]
      %v434 = vld [vmem:[%s387 + $0x38] sm:$0xf]
      %v435 = vld [vmem:[%s387 + $0x3c] sm:$0xf]
      %v436 = vld [vmem:[%s1] sm:$0xf]
      %v437 = vld [vmem:[%s1 + $0x4] sm:$0xf]
      %v438 = vld [vmem:[%s1 + $0x8] sm:$0xf]
      %v439 = vld [vmem:[%s1 + $0xc] sm:$0xf]
      %v440 = vld [vmem:[%s4] sm:$0x1]
      %v442 = vlaneseq
      %v443 = vshrl.u32 %v442, 7
      %v444 = vsub.s32 0, %v443
      %v445 = vrot.slane %v440, %v444
      %v463 = vunpack.c.l.b16 %v420
      %v464 = vunpack.c.l.b16 %v421
      %v465 = vunpack.c.l.b16 %v422
      %v466 = vunpack.c.l.b16 %v423
      %v467 = vunpack.c.l.b16 %v424
      %v468 = vunpack.c.l.b16 %v425
      %v469 = vunpack.c.l.b16 %v426
      %v470 = vunpack.c.l.b16 %v427
      %v471 = vunpack.c.l.b16 %v428
      %v472 = vunpack.c.l.b16 %v429
      %v473 = vunpack.c.l.b16 %v430
      %v474 = vunpack.c.l.b16 %v431
      %v475 = vunpack.c.l.b16 %v432
      %v476 = vunpack.c.l.b16 %v433
      %v477 = vunpack.c.l.b16 %v434
      %v478 = vunpack.c.l.b16 %v435
      %v479 = vpack.c.b16 %v464, %v463
      %v480 = vpack.c.b16 %v466, %v465
      %v481 = vpack.c.b16 %v468, %v467
      %v482 = vpack.c.b16 %v470, %v469
      %v483 = vpack.c.b16 %v472, %v471
      %v484 = vpack.c.b16 %v474, %v473
      %v485 = vpack.c.b16 %v476, %v475
      %v486 = vpack.c.b16 %v478, %v477
      %v491 = vunpack.c.l.b16 %v436
      %v492 = vunpack.c.l.b16 %v437
      %v493 = vunpack.c.l.b16 %v438
      %v494 = vunpack.c.l.b16 %v439
      %v495 = vpack.c.b16 %v492, %v491
      %v496 = vpack.c.b16 %v494, %v493
      %vm499 = vcmask 261120
      %v501 = vsel %vm499, %v479, 0
      %v504 = vsel %vm499, %v480, 0
      %v507 = vsel %vm499, %v481, 0
      %v510 = vsel %vm499, %v482, 0
      %v513 = vsel %vm499, %v483, 0
      %v516 = vsel %vm499, %v484, 0
      %v519 = vsel %vm499, %v485, 0
      %v522 = vsel %vm499, %v486, 0
      %524 = vmatprep.subr.bf16.mxu0 0
      %525 = vmatpush1.bf16.msra.mxu0 %v495
      %526 = vmatprep.subr.bf16.mxu0 0
      %527 = vmatpush1.bf16.msra.mxu0 %v496
      %528 = vmatprep.subr.bf16.mxu0 0
      %529 = vmatpush1.bf16.msra.mxu0 0
      %530 = vmatprep.subr.bf16.mxu0 0
      %531 = vmatpush1.bf16.msra.mxu0 0
      %532 = vmatprep.subr.bf16.mxu0 0
      %533 = vmatpush1.bf16.msra.mxu0 0
      %534 = vmatprep.subr.bf16.mxu0 0
      %535 = vmatpush1.bf16.msra.mxu0 0
      %536 = vmatprep.subr.bf16.mxu0 0
      %537 = vmatpush1.bf16.msra.mxu0 0
      %538 = vmatprep.subr.bf16.mxu0 0
      %539 = vmatpush1.bf16.msra.mxu0 0
      %540 = vmatprep.subr.bf16.mxu0 0
      %541 = vmatpush1.bf16.msra.mxu0 0
      %542 = vmatprep.subr.bf16.mxu0 0
      %543 = vmatpush1.bf16.msra.mxu0 0
      %544 = vmatprep.subr.bf16.mxu0 0
      %545 = vmatpush1.bf16.msra.mxu0 0
      %546 = vmatprep.subr.bf16.mxu0 0
      %547 = vmatpush1.bf16.msra.mxu0 0
      %548 = vmatprep.subr.bf16.mxu0 0
      %549 = vmatpush1.bf16.msra.mxu0 0
      %550 = vmatprep.subr.bf16.mxu0 0
      %551 = vmatpush1.bf16.msra.mxu0 0
      %552 = vmatprep.subr.bf16.mxu0 0
      %553 = vmatpush1.bf16.msra.mxu0 0
      %554 = vmatprep.subr.bf16.mxu0 0
      %555 = vmatpush1.bf16.msra.mxu0 0
      %556 = vmatprep.mubr.bf16.mxu0 0
      %557 = vmatmul.mubr.bf16.gmra.mrb[0].mxu0 %v501
      %v558 = vpop.f32.mrb[0].mxu0
      %v559 = vadd.f32 %v445, %v558
      %v560 = vpop.f32.mrb[0].mxu0
      %v561 = vpop.f32.mrb[0].mxu0
      %v562 = vadd.f32 %v445, %v561
      %v563 = vpop.f32.mrb[0].mxu0
      %564 = vmatprep.mubr.bf16.mxu0 0
      %565 = vmatmul.mubr.bf16.gmra.mrb[0].mxu0 %v504
      %v566 = vpop.f32.mrb[0].mxu0
      %v567 = vadd.f32 %v445, %v566
      %v568 = vpop.f32.mrb[0].mxu0
      %v569 = vpop.f32.mrb[0].mxu0
      %v570 = vadd.f32 %v445, %v569
      %v571 = vpop.f32.mrb[0].mxu0
      %572 = vmatprep.mubr.bf16.mxu0 0
      %573 = vmatmul.mubr.bf16.gmra.mrb[0].mxu0 %v507
      %v574 = vpop.f32.mrb[0].mxu0
      %v575 = vadd.f32 %v445, %v574
      %v576 = vpop.f32.mrb[0].mxu0
      %v577 = vpop.f32.mrb[0].mxu0
      %v578 = vadd.f32 %v445, %v577
      %v579 = vpop.f32.mrb[0].mxu0
      %580 = vmatprep.mubr.bf16.mxu0 0
      %581 = vmatmul.mubr.bf16.gmra.mrb[0].mxu0 %v510
      %v582 = vpop.f32.mrb[0].mxu0
      %v583 = vadd.f32 %v445, %v582
      %v584 = vpop.f32.mrb[0].mxu0
      %v585 = vpop.f32.mrb[0].mxu0
      %v586 = vadd.f32 %v445, %v585
      %v587 = vpop.f32.mrb[0].mxu0
      %588 = vmatprep.mubr.bf16.mxu0 0
      %589 = vmatmul.mubr.bf16.gmra.mrb[0].mxu0 %v513
      %v590 = vpop.f32.mrb[0].mxu0
      %v591 = vadd.f32 %v445, %v590
      %v592 = vpop.f32.mrb[0].mxu0
      %v593 = vpop.f32.mrb[0].mxu0
      %v594 = vadd.f32 %v445, %v593
      %v595 = vpop.f32.mrb[0].mxu0
      %596 = vmatprep.mubr.bf16.mxu0 0
      %597 = vmatmul.mubr.bf16.gmra.mrb[0].mxu0 %v516
      %v598 = vpop.f32.mrb[0].mxu0
      %v599 = vadd.f32 %v445, %v598
      %v600 = vpop.f32.mrb[0].mxu0
      %v601 = vpop.f32.mrb[0].mxu0
      %v602 = vadd.f32 %v445, %v601
      %v603 = vpop.f32.mrb[0].mxu0
      %604 = vmatprep.mubr.bf16.mxu0 0
      %605 = vmatmul.mubr.bf16.gmra.mrb[0].mxu0 %v519
      %v606 = vpop.f32.mrb[0].mxu0
      %v607 = vadd.f32 %v445, %v606
      %v608 = vpop.f32.mrb[0].mxu0
      %v609 = vpop.f32.mrb[0].mxu0
      %v610 = vadd.f32 %v445, %v609
      %v611 = vpop.f32.mrb[0].mxu0
      %612 = vmatprep.mubr.bf16.mxu0 0
      %613 = vmatmul.mubr.bf16.gmra.mrb[0].mxu0 %v522
      %v614 = vpop.f32.mrb[0].mxu0
      %v615 = vadd.f32 %v445, %v614
      %v616 = vpop.f32.mrb[0].mxu0
      %v617 = vpop.f32.mrb[0].mxu0
      %v618 = vadd.f32 %v445, %v617
      %v619 = vpop.f32.mrb[0].mxu0
      %620 = vdwg.mxu0
      %v621 = vmul.f32 %v559, 0.35355338
      %v622 = vmul.f32 %v562, 0.35355338
      %v623 = vmul.f32 %v567, 0.35355338
      %v624 = vmul.f32 %v570, 0.35355338
      %v625 = vmul.f32 %v575, 0.35355338
      %v626 = vmul.f32 %v578, 0.35355338
      %v627 = vmul.f32 %v583, 0.35355338
      %v628 = vmul.f32 %v586, 0.35355338
      %v629 = vmul.f32 %v591, 0.35355338
      %v630 = vmul.f32 %v594, 0.35355338
      %v631 = vmul.f32 %v599, 0.35355338
      %v632 = vmul.f32 %v602, 0.35355338
      %v633 = vmul.f32 %v607, 0.35355338
      %v634 = vmul.f32 %v610, 0.35355338
      %v635 = vmul.f32 %v615, 0.35355338
      %v636 = vmul.f32 %v618, 0.35355338
      %v637 = vpack.c.bf16 %v622, %v621
      %v638 = vpack.c.bf16 %v624, %v623
      %v639 = vpack.c.bf16 %v626, %v625
      %v640 = vpack.c.bf16 %v628, %v627
      %v641 = vpack.c.bf16 %v630, %v629
      %v642 = vpack.c.bf16 %v632, %v631
      %v643 = vpack.c.bf16 %v634, %v633
      %v644 = vpack.c.bf16 %v636, %v635
      %v645 = vld [vmem:[%s2] sm:$0xf]
      %v646 = vld [vmem:[%s2 + $0x4] sm:$0xf]
      %v647 = vld [vmem:[%s2 + $0x8] sm:$0xf]
      %v648 = vld [vmem:[%s2 + $0xc] sm:$0xf]
      %v649 = vld [vmem:[%s5] sm:$0x1]
      %v651 = vlaneseq
      %v652 = vshrl.u32 %v651, 7
      %v653 = vsub.s32 0, %v652
      %v654 = vrot.slane %v649, %v653
      %v660 = vunpack.c.l.b16 %v645
      %v661 = vunpack.c.l.b16 %v646
      %v662 = vunpack.c.l.b16 %v647
      %v663 = vunpack.c.l.b16 %v648
      %v664 = vpack.c.b16 %v661, %v660
      %v665 = vpack.c.b16 %v663, %v662
      %668 = vmatprep.subr.bf16.mxu0 0
      %669 = vmatpush1.bf16.msra.mxu0 %v664
      %670 = vmatprep.subr.bf16.mxu0 0
      %671 = vmatpush1.bf16.msra.mxu0 %v665
      %672 = vmatprep.subr.bf16.mxu0 0
      %673 = vmatpush1.bf16.msra.mxu0 0
      %674 = vmatprep.subr.bf16.mxu0 0
      %675 = vmatpush1.bf16.msra.mxu0 0
      %676 = vmatprep.subr.bf16.mxu0 0
      %677 = vmatpush1.bf16.msra.mxu0 0
      %678 = vmatprep.subr.bf16.mxu0 0
      %679 = vmatpush1.bf16.msra.mxu0 0
      %680 = vmatprep.subr.bf16.mxu0 0
      %681 = vmatpush1.bf16.msra.mxu0 0
      %682 = vmatprep.subr.bf16.mxu0 0
      %683 = vmatpush1.bf16.msra.mxu0 0
      %684 = vmatprep.subr.bf16.mxu0 0
      %685 = vmatpush1.bf16.msra.mxu0 0
      %686 = vmatprep.subr.bf16.mxu0 0
      %687 = vmatpush1.bf16.msra.mxu0 0
      %688 = vmatprep.subr.bf16.mxu0 0
      %689 = vmatpush1.bf16.msra.mxu0 0
      %690 = vmatprep.subr.bf16.mxu0 0
      %691 = vmatpush1.bf16.msra.mxu0 0
      %692 = vmatprep.subr.bf16.mxu0 0
      %693 = vmatpush1.bf16.msra.mxu0 0
      %694 = vmatprep.subr.bf16.mxu0 0
      %695 = vmatpush1.bf16.msra.mxu0 0
      %696 = vmatprep.subr.bf16.mxu0 0
      %697 = vmatpush1.bf16.msra.mxu0 0
      %698 = vmatprep.subr.bf16.mxu0 0
      %699 = vmatpush1.bf16.msra.mxu0 0
      %700 = vmatprep.mubr.bf16.mxu0 0
      %701 = vmatmul.mubr.bf16.gmra.mrb[0].mxu0 %v501
      %v702 = vpop.f32.mrb[0].mxu0
      %v703 = vadd.f32 %v654, %v702
      %v704 = vpop.f32.mrb[0].mxu0
      %v705 = vpop.f32.mrb[0].mxu0
      %v706 = vadd.f32 %v654, %v705
      %v707 = vpop.f32.mrb[0].mxu0
      %708 = vmatprep.mubr.bf16.mxu0 0
      %709 = vmatmul.mubr.bf16.gmra.mrb[0].mxu0 %v504
      %v710 = vpop.f32.mrb[0].mxu0
      %v711 = vadd.f32 %v654, %v710
      %v712 = vpop.f32.mrb[0].mxu0
      %v713 = vpop.f32.mrb[0].mxu0
      %v714 = vadd.f32 %v654, %v713
      %v715 = vpop.f32.mrb[0].mxu0
      %716 = vmatprep.mubr.bf16.mxu0 0
      %717 = vmatmul.mubr.bf16.gmra.mrb[0].mxu0 %v507
      %v718 = vpop.f32.mrb[0].mxu0
      %v719 = vadd.f32 %v654, %v718
      %v720 = vpop.f32.mrb[0].mxu0
      %v721 = vpop.f32.mrb[0].mxu0
      %v722 = vadd.f32 %v654, %v721
      %v723 = vpop.f32.mrb[0].mxu0
      %724 = vmatprep.mubr.bf16.mxu0 0
      %725 = vmatmul.mubr.bf16.gmra.mrb[0].mxu0 %v510
      %v726 = vpop.f32.mrb[0].mxu0
      %v727 = vadd.f32 %v654, %v726
      %v728 = vpop.f32.mrb[0].mxu0
      %v729 = vpop.f32.mrb[0].mxu0
      %v730 = vadd.f32 %v654, %v729
      %v731 = vpop.f32.mrb[0].mxu0
      %732 = vmatprep.mubr.bf16.mxu0 0
      %733 = vmatmul.mubr.bf16.gmra.mrb[0].mxu0 %v513
      %v734 = vpop.f32.mrb[0].mxu0
      %v735 = vadd.f32 %v654, %v734
      %v736 = vpop.f32.mrb[0].mxu0
      %v737 = vpop.f32.mrb[0].mxu0
      %v738 = vadd.f32 %v654, %v737
      %v739 = vpop.f32.mrb[0].mxu0
      %740 = vmatprep.mubr.bf16.mxu0 0
      %741 = vmatmul.mubr.bf16.gmra.mrb[0].mxu0 %v516
      %v742 = vpop.f32.mrb[0].mxu0
      %v743 = vadd.f32 %v654, %v742
      %v744 = vpop.f32.mrb[0].mxu0
      %v745 = vpop.f32.mrb[0].mxu0
      %v746 = vadd.f32 %v654, %v745
      %v747 = vpop.f32.mrb[0].mxu0
      %748 = vmatprep.mubr.bf16.mxu0 0
      %749 = vmatmul.mubr.bf16.gmra.mrb[0].mxu0 %v519
      %v750 = vpop.f32.mrb[0].mxu0
      %v751 = vadd.f32 %v654, %v750
      %v752 = vpop.f32.mrb[0].mxu0
      %v753 = vpop.f32.mrb[0].mxu0
      %v754 = vadd.f32 %v654, %v753
      %v755 = vpop.f32.mrb[0].mxu0
      %756 = vmatprep.mubr.bf16.mxu0 0
      %757 = vmatmul.mubr.bf16.gmra.mrb[0].mxu0 %v522
      %v758 = vpop.f32.mrb[0].mxu0
      %v759 = vadd.f32 %v654, %v758
      %v760 = vpop.f32.mrb[0].mxu0
      %v761 = vpop.f32.mrb[0].mxu0
      %v762 = vadd.f32 %v654, %v761
      %v763 = vpop.f32.mrb[0].mxu0
      %764 = vdwg.mxu0
      %v765 = vpack.c.bf16 %v706, %v703
      %v766 = vpack.c.bf16 %v714, %v711
      %v767 = vpack.c.bf16 %v722, %v719
      %v768 = vpack.c.bf16 %v730, %v727
      %v769 = vpack.c.bf16 %v738, %v735
      %v770 = vpack.c.bf16 %v746, %v743
      %v771 = vpack.c.bf16 %v754, %v751
      %v772 = vpack.c.bf16 %v762, %v759
      %v773 = vld [vmem:[%s3] sm:$0xf]
      %v774 = vld [vmem:[%s3 + $0x4] sm:$0xf]
      %v775 = vld [vmem:[%s3 + $0x8] sm:$0xf]
      %v776 = vld [vmem:[%s3 + $0xc] sm:$0xf]
      %v777 = vld [vmem:[%s6] sm:$0x1]
      %v779 = vlaneseq
      %v780 = vshrl.u32 %v779, 7
      %v781 = vsub.s32 0, %v780
      %v782 = vrot.slane %v777, %v781
      %v788 = vunpack.c.l.b16 %v773
      %v789 = vunpack.c.l.b16 %v774
      %v790 = vunpack.c.l.b16 %v775
      %v791 = vunpack.c.l.b16 %v776
      %v792 = vpack.c.b16 %v789, %v788
      %v793 = vpack.c.b16 %v791, %v790
      %796 = vmatprep.subr.bf16.mxu0 0
      %797 = vmatpush1.bf16.msra.mxu0 %v792
      %798 = vmatprep.subr.bf16.mxu0 0
      %799 = vmatpush1.bf16.msra.mxu0 %v793
      %800 = vmatprep.subr.bf16.mxu0 0
      %801 = vmatpush1.bf16.msra.mxu0 0
      %802 = vmatprep.subr.bf16.mxu0 0
      %803 = vmatpush1.bf16.msra.mxu0 0
      %804 = vmatprep.subr.bf16.mxu0 0
      %805 = vmatpush1.bf16.msra.mxu0 0
      %806 = vmatprep.subr.bf16.mxu0 0
      %807 = vmatpush1.bf16.msra.mxu0 0
      %808 = vmatprep.subr.bf16.mxu0 0
      %809 = vmatpush1.bf16.msra.mxu0 0
      %810 = vmatprep.subr.bf16.mxu0 0
      %811 = vmatpush1.bf16.msra.mxu0 0
      %812 = vmatprep.subr.bf16.mxu0 0
      %813 = vmatpush1.bf16.msra.mxu0 0
      %814 = vmatprep.subr.bf16.mxu0 0
      %815 = vmatpush1.bf16.msra.mxu0 0
      %816 = vmatprep.subr.bf16.mxu0 0
      %817 = vmatpush1.bf16.msra.mxu0 0
      %818 = vmatprep.subr.bf16.mxu0 0
      %819 = vmatpush1.bf16.msra.mxu0 0
      %820 = vmatprep.subr.bf16.mxu0 0
      %821 = vmatpush1.bf16.msra.mxu0 0
      %822 = vmatprep.subr.bf16.mxu0 0
      %823 = vmatpush1.bf16.msra.mxu0 0
      %824 = vmatprep.subr.bf16.mxu0 0
      %825 = vmatpush1.bf16.msra.mxu0 0
      %826 = vmatprep.subr.bf16.mxu0 0
      %827 = vmatpush1.bf16.msra.mxu0 0
      %828 = vmatprep.mubr.bf16.mxu0 0
      %829 = vmatmul.mubr.bf16.gmra.mrb[0].mxu0 %v501
      %v830 = vpop.f32.mrb[0].mxu0
      %v831 = vadd.f32 %v782, %v830
      %v832 = vpop.f32.mrb[0].mxu0
      %v833 = vpop.f32.mrb[0].mxu0
      %v834 = vadd.f32 %v782, %v833
      %v835 = vpop.f32.mrb[0].mxu0
      %836 = vmatprep.mubr.bf16.mxu0 0
      %837 = vmatmul.mubr.bf16.gmra.mrb[0].mxu0 %v504
      %v838 = vpop.f32.mrb[0].mxu0
      %v839 = vadd.f32 %v782, %v838
      %v840 = vpop.f32.mrb[0].mxu0
      %v841 = vpop.f32.mrb[0].mxu0
      %v842 = vadd.f32 %v782, %v841
      %v843 = vpop.f32.mrb[0].mxu0
      %844 = vmatprep.mubr.bf16.mxu0 0
      %845 = vmatmul.mubr.bf16.gmra.mrb[0].mxu0 %v507
      %v846 = vpop.f32.mrb[0].mxu0
      %v847 = vadd.f32 %v782, %v846
      %v848 = vpop.f32.mrb[0].mxu0
      %v849 = vpop.f32.mrb[0].mxu0
      %v850 = vadd.f32 %v782, %v849
      %v851 = vpop.f32.mrb[0].mxu0
      %852 = vmatprep.mubr.bf16.mxu0 0
      %853 = vmatmul.mubr.bf16.gmra.mrb[0].mxu0 %v510
      %v854 = vpop.f32.mrb[0].mxu0
      %v855 = vadd.f32 %v782, %v854
      %v856 = vpop.f32.mrb[0].mxu0
      %v857 = vpop.f32.mrb[0].mxu0
      %v858 = vadd.f32 %v782, %v857
      %v859 = vpop.f32.mrb[0].mxu0
      %860 = vmatprep.mubr.bf16.mxu0 0
      %861 = vmatmul.mubr.bf16.gmra.mrb[0].mxu0 %v513
      %v862 = vpop.f32.mrb[0].mxu0
      %v863 = vadd.f32 %v782, %v862
      %v864 = vpop.f32.mrb[0].mxu0
      %v865 = vpop.f32.mrb[0].mxu0
      %v866 = vadd.f32 %v782, %v865
      %v867 = vpop.f32.mrb[0].mxu0
      %868 = vmatprep.mubr.bf16.mxu0 0
      %869 = vmatmul.mubr.bf16.gmra.mrb[0].mxu0 %v516
      %v870 = vpop.f32.mrb[0].mxu0
      %v871 = vadd.f32 %v782, %v870
      %v872 = vpop.f32.mrb[0].mxu0
      %v873 = vpop.f32.mrb[0].mxu0
      %v874 = vadd.f32 %v782, %v873
      %v875 = vpop.f32.mrb[0].mxu0
      %876 = vmatprep.mubr.bf16.mxu0 0
      %877 = vmatmul.mubr.bf16.gmra.mrb[0].mxu0 %v519
      %v878 = vpop.f32.mrb[0].mxu0
      %v879 = vadd.f32 %v782, %v878
      %v880 = vpop.f32.mrb[0].mxu0
      %v881 = vpop.f32.mrb[0].mxu0
      %v882 = vadd.f32 %v782, %v881
      %v883 = vpop.f32.mrb[0].mxu0
      %884 = vmatprep.mubr.bf16.mxu0 0
      %885 = vmatmul.mubr.bf16.gmra.mrb[0].mxu0 %v522
      %v886 = vpop.f32.mrb[0].mxu0
      %v887 = vadd.f32 %v782, %v886
      %v888 = vpop.f32.mrb[0].mxu0
      %v889 = vpop.f32.mrb[0].mxu0
      %v890 = vadd.f32 %v782, %v889
      %v891 = vpop.f32.mrb[0].mxu0
      %892 = vdwg.mxu0
      %v893 = vpack.c.bf16 %v834, %v831
      %v894 = vpack.c.bf16 %v842, %v839
      %v895 = vpack.c.bf16 %v850, %v847
      %v896 = vpack.c.bf16 %v858, %v855
      %v897 = vpack.c.bf16 %v866, %v863
      %v898 = vpack.c.bf16 %v874, %v871
      %v899 = vpack.c.bf16 %v882, %v879
      %v900 = vpack.c.bf16 %v890, %v887
      %v909 = vunpack.c.l.b16 %v637
      %v910 = vunpack.c.h.b16 %v637
      %v911 = vunpack.c.l.b16 %v638
      %v912 = vunpack.c.h.b16 %v638
      %v913 = vunpack.c.l.b16 %v639
      %v914 = vunpack.c.h.b16 %v639
      %v915 = vunpack.c.l.b16 %v640
      %v916 = vunpack.c.h.b16 %v640
      %v917 = vunpack.c.l.b16 %v641
      %v918 = vunpack.c.h.b16 %v641
      %v919 = vunpack.c.l.b16 %v642
      %v920 = vunpack.c.h.b16 %v642
      %v921 = vunpack.c.l.b16 %v643
      %v922 = vunpack.c.h.b16 %v643
      %v923 = vunpack.c.l.b16 %v644
      %v924 = vunpack.c.h.b16 %v644
      %v925 = vpack.c.b16 %v909, %v909
      %v926 = vpack.c.b16 %v910, %v910
      %v927 = vpack.c.b16 %v911, %v911
      %v928 = vpack.c.b16 %v912, %v912
      %v929 = vpack.c.b16 %v913, %v913
      %v930 = vpack.c.b16 %v914, %v914
      %v931 = vpack.c.b16 %v915, %v915
      %v932 = vpack.c.b16 %v916, %v916
      %v933 = vpack.c.b16 %v917, %v917
      %v934 = vpack.c.b16 %v918, %v918
      %v935 = vpack.c.b16 %v919, %v919
      %v936 = vpack.c.b16 %v920, %v920
      %v937 = vpack.c.b16 %v921, %v921
      %v938 = vpack.c.b16 %v922, %v922
      %v939 = vpack.c.b16 %v923, %v923
      %v940 = vpack.c.b16 %v924, %v924
      %vm957 = vcmask 60416
      %958 = vst.msk [vmem:[%s397] sm:$0xf] %vm957, %v925
      %959 = vst.msk [vmem:[%s397 + $0x4] sm:$0xf] %vm957, %v926
      %960 = vst.msk [vmem:[%s397 + $0x8] sm:$0xf] %vm957, %v927
      %961 = vst.msk [vmem:[%s397 + $0xc] sm:$0xf] %vm957, %v928
      %962 = vst.msk [vmem:[%s397 + $0x10] sm:$0xf] %vm957, %v929
      %963 = vst.msk [vmem:[%s397 + $0x14] sm:$0xf] %vm957, %v930
      %964 = vst.msk [vmem:[%s397 + $0x18] sm:$0xf] %vm957, %v931
      %965 = vst.msk [vmem:[%s397 + $0x1c] sm:$0xf] %vm957, %v932
      %966 = vst.msk [vmem:[%s397 + $0x20] sm:$0xf] %vm957, %v933
      %967 = vst.msk [vmem:[%s397 + $0x24] sm:$0xf] %vm957, %v934
      %968 = vst.msk [vmem:[%s397 + $0x28] sm:$0xf] %vm957, %v935
      %969 = vst.msk [vmem:[%s397 + $0x2c] sm:$0xf] %vm957, %v936
      %970 = vst.msk [vmem:[%s397 + $0x30] sm:$0xf] %vm957, %v937
      %971 = vst.msk [vmem:[%s397 + $0x34] sm:$0xf] %vm957, %v938
      %972 = vst.msk [vmem:[%s397 + $0x38] sm:$0xf] %vm957, %v939
      %973 = vst.msk [vmem:[%s397 + $0x3c] sm:$0xf] %vm957, %v940
      %v982 = vunpack.c.l.b16 %v765
      %v983 = vunpack.c.h.b16 %v765
      %v984 = vunpack.c.l.b16 %v766
      %v985 = vunpack.c.h.b16 %v766
      %v986 = vunpack.c.l.b16 %v767
      %v987 = vunpack.c.h.b16 %v767
      %v988 = vunpack.c.l.b16 %v768
      %v989 = vunpack.c.h.b16 %v768
      %v990 = vunpack.c.l.b16 %v769
      %v991 = vunpack.c.h.b16 %v769
      %v992 = vunpack.c.l.b16 %v770
      %v993 = vunpack.c.h.b16 %v770
      %v994 = vunpack.c.l.b16 %v771
      %v995 = vunpack.c.h.b16 %v771
      %v996 = vunpack.c.l.b16 %v772
      %v997 = vunpack.c.h.b16 %v772
      %v998 = vpack.c.b16 %v982, %v982
      %v999 = vpack.c.b16 %v983, %v983
      %v1000 = vpack.c.b16 %v984, %v984
      %v1001 = vpack.c.b16 %v985, %v985
      %v1002 = vpack.c.b16 %v986, %v986
      %v1003 = vpack.c.b16 %v987, %v987
      %v1004 = vpack.c.b16 %v988, %v988
      %v1005 = vpack.c.b16 %v989, %v989
      %v1006 = vpack.c.b16 %v990, %v990
      %v1007 = vpack.c.b16 %v991, %v991
      %v1008 = vpack.c.b16 %v992, %v992
      %v1009 = vpack.c.b16 %v993, %v993
      %v1010 = vpack.c.b16 %v994, %v994
      %v1011 = vpack.c.b16 %v995, %v995
      %v1012 = vpack.c.b16 %v996, %v996
      %v1013 = vpack.c.b16 %v997, %v997
      %1030 = vst.msk [vmem:[%s407] sm:$0xf] %vm957, %v998
      %1031 = vst.msk [vmem:[%s407 + $0x4] sm:$0xf] %vm957, %v999
      %1032 = vst.msk [vmem:[%s407 + $0x8] sm:$0xf] %vm957, %v1000
      %1033 = vst.msk [vmem:[%s407 + $0xc] sm:$0xf] %vm957, %v1001
      %1034 = vst.msk [vmem:[%s407 + $0x10] sm:$0xf] %vm957, %v1002
      %1035 = vst.msk [vmem:[%s407 + $0x14] sm:$0xf] %vm957, %v1003
      %1036 = vst.msk [vmem:[%s407 + $0x18] sm:$0xf] %vm957, %v1004
      %1037 = vst.msk [vmem:[%s407 + $0x1c] sm:$0xf] %vm957, %v1005
      %1038 = vst.msk [vmem:[%s407 + $0x20] sm:$0xf] %vm957, %v1006
      %1039 = vst.msk [vmem:[%s407 + $0x24] sm:$0xf] %vm957, %v1007
      %1040 = vst.msk [vmem:[%s407 + $0x28] sm:$0xf] %vm957, %v1008
      %1041 = vst.msk [vmem:[%s407 + $0x2c] sm:$0xf] %vm957, %v1009
      %1042 = vst.msk [vmem:[%s407 + $0x30] sm:$0xf] %vm957, %v1010
      %1043 = vst.msk [vmem:[%s407 + $0x34] sm:$0xf] %vm957, %v1011
      %1044 = vst.msk [vmem:[%s407 + $0x38] sm:$0xf] %vm957, %v1012
      %1045 = vst.msk [vmem:[%s407 + $0x3c] sm:$0xf] %vm957, %v1013
      %v1054 = vunpack.c.l.b16 %v893
      %v1055 = vunpack.c.h.b16 %v893
      %v1056 = vunpack.c.l.b16 %v894
      %v1057 = vunpack.c.h.b16 %v894
      %v1058 = vunpack.c.l.b16 %v895
      %v1059 = vunpack.c.h.b16 %v895
      %v1060 = vunpack.c.l.b16 %v896
      %v1061 = vunpack.c.h.b16 %v896
      %v1062 = vunpack.c.l.b16 %v897
      %v1063 = vunpack.c.h.b16 %v897
      %v1064 = vunpack.c.l.b16 %v898
      %v1065 = vunpack.c.h.b16 %v898
      %v1066 = vunpack.c.l.b16 %v899
      %v1067 = vunpack.c.h.b16 %v899
      %v1068 = vunpack.c.l.b16 %v900
      %v1069 = vunpack.c.h.b16 %v900
      %v1070 = vpack.c.b16 %v1054, %v1054
      %v1071 = vpack.c.b16 %v1055, %v1055
      %v1072 = vpack.c.b16 %v1056, %v1056
      %v1073 = vpack.c.b16 %v1057, %v1057
      %v1074 = vpack.c.b16 %v1058, %v1058
      %v1075 = vpack.c.b16 %v1059, %v1059
      %v1076 = vpack.c.b16 %v1060, %v1060
      %v1077 = vpack.c.b16 %v1061, %v1061
      %v1078 = vpack.c.b16 %v1062, %v1062
      %v1079 = vpack.c.b16 %v1063, %v1063
      %v1080 = vpack.c.b16 %v1064, %v1064
      %v1081 = vpack.c.b16 %v1065, %v1065
      %v1082 = vpack.c.b16 %v1066, %v1066
      %v1083 = vpack.c.b16 %v1067, %v1067
      %v1084 = vpack.c.b16 %v1068, %v1068
      %v1085 = vpack.c.b16 %v1069, %v1069
      %1102 = vst.msk [vmem:[%s417] sm:$0xf] %vm957, %v1070
      %1103 = vst.msk [vmem:[%s417 + $0x4] sm:$0xf] %vm957, %v1071
      %1104 = vst.msk [vmem:[%s417 + $0x8] sm:$0xf] %vm957, %v1072
      %1105 = vst.msk [vmem:[%s417 + $0xc] sm:$0xf] %vm957, %v1073
      %1106 = vst.msk [vmem:[%s417 + $0x10] sm:$0xf] %vm957, %v1074
      %1107 = vst.msk [vmem:[%s417 + $0x14] sm:$0xf] %vm957, %v1075
      %1108 = vst.msk [vmem:[%s417 + $0x18] sm:$0xf] %vm957, %v1076
      %1109 = vst.msk [vmem:[%s417 + $0x1c] sm:$0xf] %vm957, %v1077
      %1110 = vst.msk [vmem:[%s417 + $0x20] sm:$0xf] %vm957, %v1078
      %1111 = vst.msk [vmem:[%s417 + $0x24] sm:$0xf] %vm957, %v1079
      %1112 = vst.msk [vmem:[%s417 + $0x28] sm:$0xf] %vm957, %v1080
      %1113 = vst.msk [vmem:[%s417 + $0x2c] sm:$0xf] %vm957, %v1081
      %1114 = vst.msk [vmem:[%s417 + $0x30] sm:$0xf] %vm957, %v1082
      %1115 = vst.msk [vmem:[%s417 + $0x34] sm:$0xf] %vm957, %v1083
      %1116 = vst.msk [vmem:[%s417 + $0x38] sm:$0xf] %vm957, %v1084
      %1117 = vst.msk [vmem:[%s417 + $0x3c] sm:$0xf] %vm957, %v1085
      %1118 = vrot.lane.b32.xlu0 %v925, 120
      %v1119 = vpop.permute.xlu0 %1118
      %1120 = vrot.lane.b32.xlu0 %v926, 120
      %v1121 = vpop.permute.xlu0 %1120
      %1122 = vrot.lane.b32.xlu0 %v927, 120
      %v1123 = vpop.permute.xlu0 %1122
      %1124 = vrot.lane.b32.xlu0 %v928, 120
      %v1125 = vpop.permute.xlu0 %1124
      %1126 = vrot.lane.b32.xlu0 %v929, 120
      %v1127 = vpop.permute.xlu0 %1126
      %1128 = vrot.lane.b32.xlu0 %v930, 120
      %v1129 = vpop.permute.xlu0 %1128
      %1130 = vrot.lane.b32.xlu0 %v931, 120
      %v1131 = vpop.permute.xlu0 %1130
      %1132 = vrot.lane.b32.xlu0 %v932, 120
      %v1133 = vpop.permute.xlu0 %1132
      %1134 = vrot.lane.b32.xlu0 %v933, 120
      %v1135 = vpop.permute.xlu0 %1134
      %1136 = vrot.lane.b32.xlu0 %v934, 120
      %v1137 = vpop.permute.xlu0 %1136
      %1138 = vrot.lane.b32.xlu0 %v935, 120
      %v1139 = vpop.permute.xlu0 %1138
      %1140 = vrot.lane.b32.xlu0 %v936, 120
      %v1141 = vpop.permute.xlu0 %1140
      %1142 = vrot.lane.b32.xlu0 %v937, 120
      %v1143 = vpop.permute.xlu0 %1142
      %1144 = vrot.lane.b32.xlu0 %v938, 120
      %v1145 = vpop.permute.xlu0 %1144
      %1146 = vrot.lane.b32.xlu0 %v939, 120
      %v1147 = vpop.permute.xlu0 %1146
      %1148 = vrot.lane.b32.xlu0 %v940, 120
      %v1149 = vpop.permute.xlu0 %1148
      %s1166 = scalar_lea.vmem %s397, 64
      %1167 = vst.msk [vmem:[%s1166] sm:$0xf] %vm957, %v1119
      %1168 = vst.msk [vmem:[%s1166 + $0x4] sm:$0xf] %vm957, %v1121
      %1169 = vst.msk [vmem:[%s1166 + $0x8] sm:$0xf] %vm957, %v1123
      %1170 = vst.msk [vmem:[%s1166 + $0xc] sm:$0xf] %vm957, %v1125
      %1171 = vst.msk [vmem:[%s1166 + $0x10] sm:$0xf] %vm957, %v1127
      %1172 = vst.msk [vmem:[%s1166 + $0x14] sm:$0xf] %vm957, %v1129
      %1173 = vst.msk [vmem:[%s1166 + $0x18] sm:$0xf] %vm957, %v1131
      %1174 = vst.msk [vmem:[%s1166 + $0x1c] sm:$0xf] %vm957, %v1133
      %1175 = vst.msk [vmem:[%s1166 + $0x20] sm:$0xf] %vm957, %v1135
      %1176 = vst.msk [vmem:[%s1166 + $0x24] sm:$0xf] %vm957, %v1137
      %1177 = vst.msk [vmem:[%s1166 + $0x28] sm:$0xf] %vm957, %v1139
      %1178 = vst.msk [vmem:[%s1166 + $0x2c] sm:$0xf] %vm957, %v1141
      %1179 = vst.msk [vmem:[%s1166 + $0x30] sm:$0xf] %vm957, %v1143
      %1180 = vst.msk [vmem:[%s1166 + $0x34] sm:$0xf] %vm957, %v1145
      %1181 = vst.msk [vmem:[%s1166 + $0x38] sm:$0xf] %vm957, %v1147
      %1182 = vst.msk [vmem:[%s1166 + $0x3c] sm:$0xf] %vm957, %v1149
      %1183 = vrot.lane.b32.xlu0 %v998, 120
      %v1184 = vpop.permute.xlu0 %1183
      %1185 = vrot.lane.b32.xlu0 %v999, 120
      %v1186 = vpop.permute.xlu0 %1185
      %1187 = vrot.lane.b32.xlu0 %v1000, 120
      %v1188 = vpop.permute.xlu0 %1187
      %1189 = vrot.lane.b32.xlu0 %v1001, 120
      %v1190 = vpop.permute.xlu0 %1189
      %1191 = vrot.lane.b32.xlu0 %v1002, 120
      %v1192 = vpop.permute.xlu0 %1191
      %1193 = vrot.lane.b32.xlu0 %v1003, 120
      %v1194 = vpop.permute.xlu0 %1193
      %1195 = vrot.lane.b32.xlu0 %v1004, 120
      %v1196 = vpop.permute.xlu0 %1195
      %1197 = vrot.lane.b32.xlu0 %v1005, 120
      %v1198 = vpop.permute.xlu0 %1197
      %1199 = vrot.lane.b32.xlu0 %v1006, 120
      %v1200 = vpop.permute.xlu0 %1199
      %1201 = vrot.lane.b32.xlu0 %v1007, 120
      %v1202 = vpop.permute.xlu0 %1201
      %1203 = vrot.lane.b32.xlu0 %v1008, 120
      %v1204 = vpop.permute.xlu0 %1203
      %1205 = vrot.lane.b32.xlu0 %v1009, 120
      %v1206 = vpop.permute.xlu0 %1205
      %1207 = vrot.lane.b32.xlu0 %v1010, 120
      %v1208 = vpop.permute.xlu0 %1207
      %1209 = vrot.lane.b32.xlu0 %v1011, 120
      %v1210 = vpop.permute.xlu0 %1209
      %1211 = vrot.lane.b32.xlu0 %v1012, 120
      %v1212 = vpop.permute.xlu0 %1211
      %1213 = vrot.lane.b32.xlu0 %v1013, 120
      %v1214 = vpop.permute.xlu0 %1213
      %s1231 = scalar_lea.vmem %s407, 64
      %1232 = vst.msk [vmem:[%s1231] sm:$0xf] %vm957, %v1184
      %1233 = vst.msk [vmem:[%s1231 + $0x4] sm:$0xf] %vm957, %v1186
      %1234 = vst.msk [vmem:[%s1231 + $0x8] sm:$0xf] %vm957, %v1188
      %1235 = vst.msk [vmem:[%s1231 + $0xc] sm:$0xf] %vm957, %v1190
      %1236 = vst.msk [vmem:[%s1231 + $0x10] sm:$0xf] %vm957, %v1192
      %1237 = vst.msk [vmem:[%s1231 + $0x14] sm:$0xf] %vm957, %v1194
      %1238 = vst.msk [vmem:[%s1231 + $0x18] sm:$0xf] %vm957, %v1196
      %1239 = vst.msk [vmem:[%s1231 + $0x1c] sm:$0xf] %vm957, %v1198
      %1240 = vst.msk [vmem:[%s1231 + $0x20] sm:$0xf] %vm957, %v1200
      %1241 = vst.msk [vmem:[%s1231 + $0x24] sm:$0xf] %vm957, %v1202
      %1242 = vst.msk [vmem:[%s1231 + $0x28] sm:$0xf] %vm957, %v1204
      %1243 = vst.msk [vmem:[%s1231 + $0x2c] sm:$0xf] %vm957, %v1206
      %1244 = vst.msk [vmem:[%s1231 + $0x30] sm:$0xf] %vm957, %v1208
      %1245 = vst.msk [vmem:[%s1231 + $0x34] sm:$0xf] %vm957, %v1210
      %1246 = vst.msk [vmem:[%s1231 + $0x38] sm:$0xf] %vm957, %v1212
      %1247 = vst.msk [vmem:[%s1231 + $0x3c] sm:$0xf] %vm957, %v1214
      %1248 = vrot.lane.b32.xlu0 %v1070, 120
      %v1249 = vpop.permute.xlu0 %1248
      %1250 = vrot.lane.b32.xlu0 %v1071, 120
      %v1251 = vpop.permute.xlu0 %1250
      %1252 = vrot.lane.b32.xlu0 %v1072, 120
      %v1253 = vpop.permute.xlu0 %1252
      %1254 = vrot.lane.b32.xlu0 %v1073, 120
      %v1255 = vpop.permute.xlu0 %1254
      %1256 = vrot.lane.b32.xlu0 %v1074, 120
      %v1257 = vpop.permute.xlu0 %1256
      %1258 = vrot.lane.b32.xlu0 %v1075, 120
      %v1259 = vpop.permute.xlu0 %1258
      %1260 = vrot.lane.b32.xlu0 %v1076, 120
      %v1261 = vpop.permute.xlu0 %1260
      %1262 = vrot.lane.b32.xlu0 %v1077, 120
      %v1263 = vpop.permute.xlu0 %1262
      %1264 = vrot.lane.b32.xlu0 %v1078, 120
      %v1265 = vpop.permute.xlu0 %1264
      %1266 = vrot.lane.b32.xlu0 %v1079, 120
      %v1267 = vpop.permute.xlu0 %1266
      %1268 = vrot.lane.b32.xlu0 %v1080, 120
      %v1269 = vpop.permute.xlu0 %1268
      %1270 = vrot.lane.b32.xlu0 %v1081, 120
      %v1271 = vpop.permute.xlu0 %1270
      %1272 = vrot.lane.b32.xlu0 %v1082, 120
      %v1273 = vpop.permute.xlu0 %1272
      %1274 = vrot.lane.b32.xlu0 %v1083, 120
      %v1275 = vpop.permute.xlu0 %1274
      %1276 = vrot.lane.b32.xlu0 %v1084, 120
      %v1277 = vpop.permute.xlu0 %1276
      %1278 = vrot.lane.b32.xlu0 %v1085, 120
      %v1279 = vpop.permute.xlu0 %1278
      %s1296 = scalar_lea.vmem %s417, 64
      %1297 = vst.msk [vmem:[%s1296] sm:$0xf] %vm957, %v1249
      %1298 = vst.msk [vmem:[%s1296 + $0x4] sm:$0xf] %vm957, %v1251
      %1299 = vst.msk [vmem:[%s1296 + $0x8] sm:$0xf] %vm957, %v1253
      %1300 = vst.msk [vmem:[%s1296 + $0xc] sm:$0xf] %vm957, %v1255
      %1301 = vst.msk [vmem:[%s1296 + $0x10] sm:$0xf] %vm957, %v1257
      %1302 = vst.msk [vmem:[%s1296 + $0x14] sm:$0xf] %vm957, %v1259
      %1303 = vst.msk [vmem:[%s1296 + $0x18] sm:$0xf] %vm957, %v1261
      %1304 = vst.msk [vmem:[%s1296 + $0x1c] sm:$0xf] %vm957, %v1263
      %1305 = vst.msk [vmem:[%s1296 + $0x20] sm:$0xf] %vm957, %v1265
      %1306 = vst.msk [vmem:[%s1296 + $0x24] sm:$0xf] %vm957, %v1267
      %1307 = vst.msk [vmem:[%s1296 + $0x28] sm:$0xf] %vm957, %v1269
      %1308 = vst.msk [vmem:[%s1296 + $0x2c] sm:$0xf] %vm957, %v1271
      %1309 = vst.msk [vmem:[%s1296 + $0x30] sm:$0xf] %vm957, %v1273
      %1310 = vst.msk [vmem:[%s1296 + $0x34] sm:$0xf] %vm957, %v1275
      %1311 = vst.msk [vmem:[%s1296 + $0x38] sm:$0xf] %vm957, %v1277
      %1312 = vst.msk [vmem:[%s1296 + $0x3c] sm:$0xf] %vm957, %v1279
      %1313 = vrot.lane.b32.xlu0 %v925, 112
      %v1314 = vpop.permute.xlu0 %1313
      %1315 = vrot.lane.b32.xlu0 %v926, 112
      %v1316 = vpop.permute.xlu0 %1315
      %1317 = vrot.lane.b32.xlu0 %v927, 112
      %v1318 = vpop.permute.xlu0 %1317
      %1319 = vrot.lane.b32.xlu0 %v928, 112
      %v1320 = vpop.permute.xlu0 %1319
      %1321 = vrot.lane.b32.xlu0 %v929, 112
      %v1322 = vpop.permute.xlu0 %1321
      %1323 = vrot.lane.b32.xlu0 %v930, 112
      %v1324 = vpop.permute.xlu0 %1323
      %1325 = vrot.lane.b32.xlu0 %v931, 112
      %v1326 = vpop.permute.xlu0 %1325
      %1327 = vrot.lane.b32.xlu0 %v932, 112
      %v1328 = vpop.permute.xlu0 %1327
      %1329 = vrot.lane.b32.xlu0 %v933, 112
      %v1330 = vpop.permute.xlu0 %1329
      %1331 = vrot.lane.b32.xlu0 %v934, 112
      %v1332 = vpop.permute.xlu0 %1331
      %1333 = vrot.lane.b32.xlu0 %v935, 112
      %v1334 = vpop.permute.xlu0 %1333
      %1335 = vrot.lane.b32.xlu0 %v936, 112
      %v1336 = vpop.permute.xlu0 %1335
      %1337 = vrot.lane.b32.xlu0 %v937, 112
      %v1338 = vpop.permute.xlu0 %1337
      %1339 = vrot.lane.b32.xlu0 %v938, 112
      %v1340 = vpop.permute.xlu0 %1339
      %1341 = vrot.lane.b32.xlu0 %v939, 112
      %v1342 = vpop.permute.xlu0 %1341
      %1343 = vrot.lane.b32.xlu0 %v940, 112
      %v1344 = vpop.permute.xlu0 %1343
      %s1361 = scalar_lea.vmem %s397, 128
      %1362 = vst.msk [vmem:[%s1361] sm:$0xf] %vm957, %v1314
      %1363 = vst.msk [vmem:[%s1361 + $0x4] sm:$0xf] %vm957, %v1316
      %1364 = vst.msk [vmem:[%s1361 + $0x8] sm:$0xf] %vm957, %v1318
      %1365 = vst.msk [vmem:[%s1361 + $0xc] sm:$0xf] %vm957, %v1320
      %1366 = vst.msk [vmem:[%s1361 + $0x10] sm:$0xf] %vm957, %v1322
      %1367 = vst.msk [vmem:[%s1361 + $0x14] sm:$0xf] %vm957, %v1324
      %1368 = vst.msk [vmem:[%s1361 + $0x18] sm:$0xf] %vm957, %v1326
      %1369 = vst.msk [vmem:[%s1361 + $0x1c] sm:$0xf] %vm957, %v1328
      %1370 = vst.msk [vmem:[%s1361 + $0x20] sm:$0xf] %vm957, %v1330
      %1371 = vst.msk [vmem:[%s1361 + $0x24] sm:$0xf] %vm957, %v1332
      %1372 = vst.msk [vmem:[%s1361 + $0x28] sm:$0xf] %vm957, %v1334
      %1373 = vst.msk [vmem:[%s1361 + $0x2c] sm:$0xf] %vm957, %v1336
      %1374 = vst.msk [vmem:[%s1361 + $0x30] sm:$0xf] %vm957, %v1338
      %1375 = vst.msk [vmem:[%s1361 + $0x34] sm:$0xf] %vm957, %v1340
      %1376 = vst.msk [vmem:[%s1361 + $0x38] sm:$0xf] %vm957, %v1342
      %1377 = vst.msk [vmem:[%s1361 + $0x3c] sm:$0xf] %vm957, %v1344
      %1378 = vrot.lane.b32.xlu0 %v998, 112
      %v1379 = vpop.permute.xlu0 %1378
      %1380 = vrot.lane.b32.xlu0 %v999, 112
      %v1381 = vpop.permute.xlu0 %1380
      %1382 = vrot.lane.b32.xlu0 %v1000, 112
      %v1383 = vpop.permute.xlu0 %1382
      %1384 = vrot.lane.b32.xlu0 %v1001, 112
      %v1385 = vpop.permute.xlu0 %1384
      %1386 = vrot.lane.b32.xlu0 %v1002, 112
      %v1387 = vpop.permute.xlu0 %1386
      %1388 = vrot.lane.b32.xlu0 %v1003, 112
      %v1389 = vpop.permute.xlu0 %1388
      %1390 = vrot.lane.b32.xlu0 %v1004, 112
      %v1391 = vpop.permute.xlu0 %1390
      %1392 = vrot.lane.b32.xlu0 %v1005, 112
      %v1393 = vpop.permute.xlu0 %1392
      %1394 = vrot.lane.b32.xlu0 %v1006, 112
      %v1395 = vpop.permute.xlu0 %1394
      %1396 = vrot.lane.b32.xlu0 %v1007, 112
      %v1397 = vpop.permute.xlu0 %1396
      %1398 = vrot.lane.b32.xlu0 %v1008, 112
      %v1399 = vpop.permute.xlu0 %1398
      %1400 = vrot.lane.b32.xlu0 %v1009, 112
      %v1401 = vpop.permute.xlu0 %1400
      %1402 = vrot.lane.b32.xlu0 %v1010, 112
      %v1403 = vpop.permute.xlu0 %1402
      %1404 = vrot.lane.b32.xlu0 %v1011, 112
      %v1405 = vpop.permute.xlu0 %1404
      %1406 = vrot.lane.b32.xlu0 %v1012, 112
      %v1407 = vpop.permute.xlu0 %1406
      %1408 = vrot.lane.b32.xlu0 %v1013, 112
      %v1409 = vpop.permute.xlu0 %1408
      %s1426 = scalar_lea.vmem %s407, 128
      %1427 = vst.msk [vmem:[%s1426] sm:$0xf] %vm957, %v1379
      %1428 = vst.msk [vmem:[%s1426 + $0x4] sm:$0xf] %vm957, %v1381
      %1429 = vst.msk [vmem:[%s1426 + $0x8] sm:$0xf] %vm957, %v1383
      %1430 = vst.msk [vmem:[%s1426 + $0xc] sm:$0xf] %vm957, %v1385
      %1431 = vst.msk [vmem:[%s1426 + $0x10] sm:$0xf] %vm957, %v1387
      %1432 = vst.msk [vmem:[%s1426 + $0x14] sm:$0xf] %vm957, %v1389
      %1433 = vst.msk [vmem:[%s1426 + $0x18] sm:$0xf] %vm957, %v1391
      %1434 = vst.msk [vmem:[%s1426 + $0x1c] sm:$0xf] %vm957, %v1393
      %1435 = vst.msk [vmem:[%s1426 + $0x20] sm:$0xf] %vm957, %v1395
      %1436 = vst.msk [vmem:[%s1426 + $0x24] sm:$0xf] %vm957, %v1397
      %1437 = vst.msk [vmem:[%s1426 + $0x28] sm:$0xf] %vm957, %v1399
      %1438 = vst.msk [vmem:[%s1426 + $0x2c] sm:$0xf] %vm957, %v1401
      %1439 = vst.msk [vmem:[%s1426 + $0x30] sm:$0xf] %vm957, %v1403
      %1440 = vst.msk [vmem:[%s1426 + $0x34] sm:$0xf] %vm957, %v1405
      %1441 = vst.msk [vmem:[%s1426 + $0x38] sm:$0xf] %vm957, %v1407
      %1442 = vst.msk [vmem:[%s1426 + $0x3c] sm:$0xf] %vm957, %v1409
      %1443 = vrot.lane.b32.xlu0 %v1070, 112
      %v1444 = vpop.permute.xlu0 %1443
      %1445 = vrot.lane.b32.xlu0 %v1071, 112
      %v1446 = vpop.permute.xlu0 %1445
      %1447 = vrot.lane.b32.xlu0 %v1072, 112
      %v1448 = vpop.permute.xlu0 %1447
      %1449 = vrot.lane.b32.xlu0 %v1073, 112
      %v1450 = vpop.permute.xlu0 %1449
      %1451 = vrot.lane.b32.xlu0 %v1074, 112
      %v1452 = vpop.permute.xlu0 %1451
      %1453 = vrot.lane.b32.xlu0 %v1075, 112
      %v1454 = vpop.permute.xlu0 %1453
      %1455 = vrot.lane.b32.xlu0 %v1076, 112
      %v1456 = vpop.permute.xlu0 %1455
      %1457 = vrot.lane.b32.xlu0 %v1077, 112
      %v1458 = vpop.permute.xlu0 %1457
      %1459 = vrot.lane.b32.xlu0 %v1078, 112
      %v1460 = vpop.permute.xlu0 %1459
      %1461 = vrot.lane.b32.xlu0 %v1079, 112
      %v1462 = vpop.permute.xlu0 %1461
      %1463 = vrot.lane.b32.xlu0 %v1080, 112
      %v1464 = vpop.permute.xlu0 %1463
      %1465 = vrot.lane.b32.xlu0 %v1081, 112
      %v1466 = vpop.permute.xlu0 %1465
      %1467 = vrot.lane.b32.xlu0 %v1082, 112
      %v1468 = vpop.permute.xlu0 %1467
      %1469 = vrot.lane.b32.xlu0 %v1083, 112
      %v1470 = vpop.permute.xlu0 %1469
      %1471 = vrot.lane.b32.xlu0 %v1084, 112
      %v1472 = vpop.permute.xlu0 %1471
      %1473 = vrot.lane.b32.xlu0 %v1085, 112
      %v1474 = vpop.permute.xlu0 %1473
      %s1491 = scalar_lea.vmem %s417, 128
      %1492 = vst.msk [vmem:[%s1491] sm:$0xf] %vm957, %v1444
      %1493 = vst.msk [vmem:[%s1491 + $0x4] sm:$0xf] %vm957, %v1446
      %1494 = vst.msk [vmem:[%s1491 + $0x8] sm:$0xf] %vm957, %v1448
      %1495 = vst.msk [vmem:[%s1491 + $0xc] sm:$0xf] %vm957, %v1450
      %1496 = vst.msk [vmem:[%s1491 + $0x10] sm:$0xf] %vm957, %v1452
      %1497 = vst.msk [vmem:[%s1491 + $0x14] sm:$0xf] %vm957, %v1454
      %1498 = vst.msk [vmem:[%s1491 + $0x18] sm:$0xf] %vm957, %v1456
      %1499 = vst.msk [vmem:[%s1491 + $0x1c] sm:$0xf] %vm957, %v1458
      %1500 = vst.msk [vmem:[%s1491 + $0x20] sm:$0xf] %vm957, %v1460
      %1501 = vst.msk [vmem:[%s1491 + $0x24] sm:$0xf] %vm957, %v1462
      %1502 = vst.msk [vmem:[%s1491 + $0x28] sm:$0xf] %vm957, %v1464
      %1503 = vst.msk [vmem:[%s1491 + $0x2c] sm:$0xf] %vm957, %v1466
      %1504 = vst.msk [vmem:[%s1491 + $0x30] sm:$0xf] %vm957, %v1468
      %1505 = vst.msk [vmem:[%s1491 + $0x34] sm:$0xf] %vm957, %v1470
      %1506 = vst.msk [vmem:[%s1491 + $0x38] sm:$0xf] %vm957, %v1472
      %1507 = vst.msk [vmem:[%s1491 + $0x3c] sm:$0xf] %vm957, %v1474
      %1508 = vrot.lane.b32.xlu0 %v925, 104
      %v1509 = vpop.permute.xlu0 %1508
      %1510 = vrot.lane.b32.xlu0 %v926, 104
      %v1511 = vpop.permute.xlu0 %1510
      %1512 = vrot.lane.b32.xlu0 %v927, 104
      %v1513 = vpop.permute.xlu0 %1512
      %1514 = vrot.lane.b32.xlu0 %v928, 104
      %v1515 = vpop.permute.xlu0 %1514
      %1516 = vrot.lane.b32.xlu0 %v929, 104
      %v1517 = vpop.permute.xlu0 %1516
      %1518 = vrot.lane.b32.xlu0 %v930, 104
      %v1519 = vpop.permute.xlu0 %1518
      %1520 = vrot.lane.b32.xlu0 %v931, 104
      %v1521 = vpop.permute.xlu0 %1520
      %1522 = vrot.lane.b32.xlu0 %v932, 104
      %v1523 = vpop.permute.xlu0 %1522
      %1524 = vrot.lane.b32.xlu0 %v933, 104
      %v1525 = vpop.permute.xlu0 %1524
      %1526 = vrot.lane.b32.xlu0 %v934, 104
      %v1527 = vpop.permute.xlu0 %1526
      %1528 = vrot.lane.b32.xlu0 %v935, 104
      %v1529 = vpop.permute.xlu0 %1528
      %1530 = vrot.lane.b32.xlu0 %v936, 104
      %v1531 = vpop.permute.xlu0 %1530
      %1532 = vrot.lane.b32.xlu0 %v937, 104
      %v1533 = vpop.permute.xlu0 %1532
      %1534 = vrot.lane.b32.xlu0 %v938, 104
      %v1535 = vpop.permute.xlu0 %1534
      %1536 = vrot.lane.b32.xlu0 %v939, 104
      %v1537 = vpop.permute.xlu0 %1536
      %1538 = vrot.lane.b32.xlu0 %v940, 104
      %v1539 = vpop.permute.xlu0 %1538
      %s1556 = scalar_lea.vmem %s397, 192
      %1557 = vst.msk [vmem:[%s1556] sm:$0xf] %vm957, %v1509
      %1558 = vst.msk [vmem:[%s1556 + $0x4] sm:$0xf] %vm957, %v1511
      %1559 = vst.msk [vmem:[%s1556 + $0x8] sm:$0xf] %vm957, %v1513
      %1560 = vst.msk [vmem:[%s1556 + $0xc] sm:$0xf] %vm957, %v1515
      %1561 = vst.msk [vmem:[%s1556 + $0x10] sm:$0xf] %vm957, %v1517
      %1562 = vst.msk [vmem:[%s1556 + $0x14] sm:$0xf] %vm957, %v1519
      %1563 = vst.msk [vmem:[%s1556 + $0x18] sm:$0xf] %vm957, %v1521
      %1564 = vst.msk [vmem:[%s1556 + $0x1c] sm:$0xf] %vm957, %v1523
      %1565 = vst.msk [vmem:[%s1556 + $0x20] sm:$0xf] %vm957, %v1525
      %1566 = vst.msk [vmem:[%s1556 + $0x24] sm:$0xf] %vm957, %v1527
      %1567 = vst.msk [vmem:[%s1556 + $0x28] sm:$0xf] %vm957, %v1529
      %1568 = vst.msk [vmem:[%s1556 + $0x2c] sm:$0xf] %vm957, %v1531
      %1569 = vst.msk [vmem:[%s1556 + $0x30] sm:$0xf] %vm957, %v1533
      %1570 = vst.msk [vmem:[%s1556 + $0x34] sm:$0xf] %vm957, %v1535
      %1571 = vst.msk [vmem:[%s1556 + $0x38] sm:$0xf] %vm957, %v1537
      %1572 = vst.msk [vmem:[%s1556 + $0x3c] sm:$0xf] %vm957, %v1539
      %1573 = vrot.lane.b32.xlu0 %v998, 104
      %v1574 = vpop.permute.xlu0 %1573
      %1575 = vrot.lane.b32.xlu0 %v999, 104
      %v1576 = vpop.permute.xlu0 %1575
      %1577 = vrot.lane.b32.xlu0 %v1000, 104
      %v1578 = vpop.permute.xlu0 %1577
      %1579 = vrot.lane.b32.xlu0 %v1001, 104
      %v1580 = vpop.permute.xlu0 %1579
      %1581 = vrot.lane.b32.xlu0 %v1002, 104
      %v1582 = vpop.permute.xlu0 %1581
      %1583 = vrot.lane.b32.xlu0 %v1003, 104
      %v1584 = vpop.permute.xlu0 %1583
      %1585 = vrot.lane.b32.xlu0 %v1004, 104
      %v1586 = vpop.permute.xlu0 %1585
      %1587 = vrot.lane.b32.xlu0 %v1005, 104
      %v1588 = vpop.permute.xlu0 %1587
      %1589 = vrot.lane.b32.xlu0 %v1006, 104
      %v1590 = vpop.permute.xlu0 %1589
      %1591 = vrot.lane.b32.xlu0 %v1007, 104
      %v1592 = vpop.permute.xlu0 %1591
      %1593 = vrot.lane.b32.xlu0 %v1008, 104
      %v1594 = vpop.permute.xlu0 %1593
      %1595 = vrot.lane.b32.xlu0 %v1009, 104
      %v1596 = vpop.permute.xlu0 %1595
      %1597 = vrot.lane.b32.xlu0 %v1010, 104
      %v1598 = vpop.permute.xlu0 %1597
      %1599 = vrot.lane.b32.xlu0 %v1011, 104
      %v1600 = vpop.permute.xlu0 %1599
      %1601 = vrot.lane.b32.xlu0 %v1012, 104
      %v1602 = vpop.permute.xlu0 %1601
      %1603 = vrot.lane.b32.xlu0 %v1013, 104
      %v1604 = vpop.permute.xlu0 %1603
      %s1621 = scalar_lea.vmem %s407, 192
      %1622 = vst.msk [vmem:[%s1621] sm:$0xf] %vm957, %v1574
      %1623 = vst.msk [vmem:[%s1621 + $0x4] sm:$0xf] %vm957, %v1576
      %1624 = vst.msk [vmem:[%s1621 + $0x8] sm:$0xf] %vm957, %v1578
      %1625 = vst.msk [vmem:[%s1621 + $0xc] sm:$0xf] %vm957, %v1580
      %1626 = vst.msk [vmem:[%s1621 + $0x10] sm:$0xf] %vm957, %v1582
      %1627 = vst.msk [vmem:[%s1621 + $0x14] sm:$0xf] %vm957, %v1584
      %1628 = vst.msk [vmem:[%s1621 + $0x18] sm:$0xf] %vm957, %v1586
      %1629 = vst.msk [vmem:[%s1621 + $0x1c] sm:$0xf] %vm957, %v1588
      %1630 = vst.msk [vmem:[%s1621 + $0x20] sm:$0xf] %vm957, %v1590
      %1631 = vst.msk [vmem:[%s1621 + $0x24] sm:$0xf] %vm957, %v1592
      %1632 = vst.msk [vmem:[%s1621 + $0x28] sm:$0xf] %vm957, %v1594
      %1633 = vst.msk [vmem:[%s1621 + $0x2c] sm:$0xf] %vm957, %v1596
      %1634 = vst.msk [vmem:[%s1621 + $0x30] sm:$0xf] %vm957, %v1598
      %1635 = vst.msk [vmem:[%s1621 + $0x34] sm:$0xf] %vm957, %v1600
      %1636 = vst.msk [vmem:[%s1621 + $0x38] sm:$0xf] %vm957, %v1602
      %1637 = vst.msk [vmem:[%s1621 + $0x3c] sm:$0xf] %vm957, %v1604
      %1638 = vrot.lane.b32.xlu0 %v1070, 104
      %v1639 = vpop.permute.xlu0 %1638
      %1640 = vrot.lane.b32.xlu0 %v1071, 104
      %v1641 = vpop.permute.xlu0 %1640
      %1642 = vrot.lane.b32.xlu0 %v1072, 104
      %v1643 = vpop.permute.xlu0 %1642
      %1644 = vrot.lane.b32.xlu0 %v1073, 104
      %v1645 = vpop.permute.xlu0 %1644
      %1646 = vrot.lane.b32.xlu0 %v1074, 104
      %v1647 = vpop.permute.xlu0 %1646
      %1648 = vrot.lane.b32.xlu0 %v1075, 104
      %v1649 = vpop.permute.xlu0 %1648
      %1650 = vrot.lane.b32.xlu0 %v1076, 104
      %v1651 = vpop.permute.xlu0 %1650
      %1652 = vrot.lane.b32.xlu0 %v1077, 104
      %v1653 = vpop.permute.xlu0 %1652
      %1654 = vrot.lane.b32.xlu0 %v1078, 104
      %v1655 = vpop.permute.xlu0 %1654
      %1656 = vrot.lane.b32.xlu0 %v1079, 104
      %v1657 = vpop.permute.xlu0 %1656
      %1658 = vrot.lane.b32.xlu0 %v1080, 104
      %v1659 = vpop.permute.xlu0 %1658
      %1660 = vrot.lane.b32.xlu0 %v1081, 104
      %v1661 = vpop.permute.xlu0 %1660
      %1662 = vrot.lane.b32.xlu0 %v1082, 104
      %v1663 = vpop.permute.xlu0 %1662
      %1664 = vrot.lane.b32.xlu0 %v1083, 104
      %v1665 = vpop.permute.xlu0 %1664
      %1666 = vrot.lane.b32.xlu0 %v1084, 104
      %v1667 = vpop.permute.xlu0 %1666
      %1668 = vrot.lane.b32.xlu0 %v1085, 104
      %v1669 = vpop.permute.xlu0 %1668
      %s1686 = scalar_lea.vmem %s417, 192
      %1687 = vst.msk [vmem:[%s1686] sm:$0xf] %vm957, %v1639
      %1688 = vst.msk [vmem:[%s1686 + $0x4] sm:$0xf] %vm957, %v1641
      %1689 = vst.msk [vmem:[%s1686 + $0x8] sm:$0xf] %vm957, %v1643
      %1690 = vst.msk [vmem:[%s1686 + $0xc] sm:$0xf] %vm957, %v1645
      %1691 = vst.msk [vmem:[%s1686 + $0x10] sm:$0xf] %vm957, %v1647
      %1692 = vst.msk [vmem:[%s1686 + $0x14] sm:$0xf] %vm957, %v1649
      %1693 = vst.msk [vmem:[%s1686 + $0x18] sm:$0xf] %vm957, %v1651
      %1694 = vst.msk [vmem:[%s1686 + $0x1c] sm:$0xf] %vm957, %v1653
      %1695 = vst.msk [vmem:[%s1686 + $0x20] sm:$0xf] %vm957, %v1655
      %1696 = vst.msk [vmem:[%s1686 + $0x24] sm:$0xf] %vm957, %v1657
      %1697 = vst.msk [vmem:[%s1686 + $0x28] sm:$0xf] %vm957, %v1659
      %1698 = vst.msk [vmem:[%s1686 + $0x2c] sm:$0xf] %vm957, %v1661
      %1699 = vst.msk [vmem:[%s1686 + $0x30] sm:$0xf] %vm957, %v1663
      %1700 = vst.msk [vmem:[%s1686 + $0x34] sm:$0xf] %vm957, %v1665
      %1701 = vst.msk [vmem:[%s1686 + $0x38] sm:$0xf] %vm957, %v1667
      %1702 = vst.msk [vmem:[%s1686 + $0x3c] sm:$0xf] %vm957, %v1669
      %s1703 = smul.u32 16, %s26
      %p1704 = scmp.lt.s32.totalorder %s25, 1
      %s1705 = scalar_select %p1704, %s25, 1
      %p1706 = scmp.lt.s32.totalorder %s1703, 15
      %s1707 = scalar_select %p1706, %s1703, 15
      %s1708 = smul.addr %s1705, 64
      %s1709 = sadd.s32 %s1707, %s1708
      %s1710 = smul.addr %s1709, 4
      %s1711 = scalar_lea.vmem %s7, %s1710
      %s1712 = smul.u32 16, %s26
      %p1713 = scmp.lt.s32.totalorder %s25, 1
      %s1714 = scalar_select %p1713, %s25, 1
      %p1715 = scmp.lt.s32.totalorder %s1712, 15
      %s1716 = scalar_select %p1715, %s1712, 15
      %s1717 = smul.addr %s1714, 64
      %s1718 = sadd.s32 %s1716, %s1717
      %s1719 = smul.addr %s1718, 4
      %s1720 = scalar_lea.vmem %s8, %s1719
      %s1721 = smul.u32 16, %s26
      %p1722 = scmp.lt.s32.totalorder %s25, 1
      %s1723 = scalar_select %p1722, %s25, 1
      %p1724 = scmp.lt.s32.totalorder %s1721, 15
      %s1725 = scalar_select %p1724, %s1721, 15
      %s1726 = smul.addr %s1723, 64
      %s1727 = sadd.s32 %s1725, %s1726
      %s1728 = smul.addr %s1727, 4
      %s1729 = scalar_lea.vmem %s9, %s1728
      // Predicated region
      $region49: #{tpu_custom_call.1} parent=47 // pred_check
        %p1730 = pneg %p207
      $region50: #{tpu_custom_call.1} parent=47 // pred_check_branch
        %1732 = sbr.rel (%p1730) target = $region52
      $region51: #{tpu_custom_call.1} parent=47 // pred_region
        %s1733 = smul.u32 16, %s26
      $region52: #{tpu_custom_call.1} parent=47 // pred_fallthru
        _
      // Predicated region
      $region53: #{tpu_custom_call.1} parent=47 // pred_check
        %p1734 = pneg %p235
      $region54: #{tpu_custom_call.1} parent=47 // pred_check_branch
        %1736 = sbr.rel (%p1734) target = $region56
      $region55: #{tpu_custom_call.1} parent=47 // pred_region
        %s1737 = smul.u32 16, %s26
      $region56: #{tpu_custom_call.1} parent=47 // pred_fallthru
        _
      // Predicated region
      $region57: #{tpu_custom_call.1} parent=47 // pred_check
        %p1738 = pneg %p263
      $region58: #{tpu_custom_call.1} parent=47 // pred_check_branch
        %1740 = sbr.rel (%p1738) target = $region60
      $region59: #{tpu_custom_call.1} parent=47 // pred_region
        %s1741 = smul.u32 16, %s26
      $region60: #{tpu_custom_call.1} parent=47 // pred_fallthru
        _
    $region48: #{tpu_custom_call.1} parent=5 // pred_fallthru
      _
    %p1742 = scmp.le.s32.totalorder 2, %s16
    // Predicated region
    $region61: #{tpu_custom_call.1} parent=5 // pred_check
      %p1743 = pneg %p1742
    $region62: #{tpu_custom_call.1} parent=5 // pred_check_branch
      %1745 = sbr.rel (%p1743) target = $region64
    $region63: #{tpu_custom_call.1} parent=5 // pred_region
      %s1746 = ssub.s32 %s16, 2
      // Predicated region
      $region65: #{tpu_custom_call.1} parent=63 // pred_check
        %p1747 = pneg %p213
      $region66: #{tpu_custom_call.1} parent=63 // pred_check_branch
        %1749 = sbr.rel (%p1747) target = $region68
      $region67: #{tpu_custom_call.1} parent=63 // pred_region
        %s1750 = smul.u32 16, %s28
        %p1751 = scmp.lt.s32.totalorder %s27, 1
        %s1752 = scalar_select %p1751, %s27, 1
        %p1753 = scmp.lt.s32.totalorder %s1750, 15
        %s1754 = scalar_select %p1753, %s1750, 15
        %s1755 = smul.addr %s1752, 64
        %s1756 = sadd.s32 %s1754, %s1755
        %s1757 = smul.addr %s1756, 4
        %s1758 = scalar_lea.vmem %s7, %s1757
      $region68: #{tpu_custom_call.1} parent=63 // pred_fallthru
        _
      // Predicated region
      $region69: #{tpu_custom_call.1} parent=63 // pred_check
        %p1759 = pneg %p241
      $region70: #{tpu_custom_call.1} parent=63 // pred_check_branch
        %1761 = sbr.rel (%p1759) target = $region72
      $region71: #{tpu_custom_call.1} parent=63 // pred_region
        %s1762 = smul.u32 16, %s28
        %p1763 = scmp.lt.s32.totalorder %s27, 1
        %s1764 = scalar_select %p1763, %s27, 1
        %p1765 = scmp.lt.s32.totalorder %s1762, 15
        %s1766 = scalar_select %p1765, %s1762, 15
        %s1767 = smul.addr %s1764, 64
        %s1768 = sadd.s32 %s1766, %s1767
        %s1769 = smul.addr %s1768, 4
        %s1770 = scalar_lea.vmem %s8, %s1769
      $region72: #{tpu_custom_call.1} parent=63 // pred_fallthru
        _
      // Predicated region
      $region73: #{tpu_custom_call.1} parent=63 // pred_check
        %p1771 = pneg %p269
      $region74: #{tpu_custom_call.1} parent=63 // pred_check_branch
        %1773 = sbr.rel (%p1771) target = $region76
      $region75: #{tpu_custom_call.1} parent=63 // pred_region
        %s1774 = smul.u32 16, %s28
        %p1775 = scmp.lt.s32.totalorder %s27, 1
        %s1776 = scalar_select %p1775, %s27, 1
        %p1777 = scmp.lt.s32.totalorder %s1774, 15
        %s1778 = scalar_select %p1777, %s1774, 15
        %s1779 = smul.addr %s1776, 64
        %s1780 = sadd.s32 %s1778, %s1779
        %s1781 = smul.addr %s1780, 4
        %s1782 = scalar_lea.vmem %s9, %s1781
      $region76: #{tpu_custom_call.1} parent=63 // pred_fallthru
        _
    $region64: #{tpu_custom_call.1} parent=5 // pred_fallthru
      _
  $region6: #{tpu_custom_call.1} parent=0 // loop_footer
    %s20 = sadd.s32 1, %s16
  $region7: #{tpu_custom_call.1} parent=0 // loop_footer_branch
    %15 = sbr.rel target = $region3
  $region8: #{tpu_custom_call.1} parent=0 // loop_exit
    _

</llo_original>
